<compile_context>
chip_gen: v5e
topology: v5e:2x2
jax: 0.10.0
libtpu: 0.0.40
codegen_flags: <defaults>
</compile_context>

<pallas_src>
import jax
import jax.numpy as jnp
from jax.experimental import pallas as pl
from jax.experimental.pallas import tpu as pltpu

IN_DIM, H1, H2, OUT_DIM = 784, 512, 256, 1
NEG_SLOPE = 0.2
MAX_TILE_B = 256  # cap on the batch tile (sublane-aligned, VMEM friendly)


def _round_up(n, m):
    return ((n + m - 1) // m) * m


def _discriminator_kernel(x_ref, w1_ref, w2_ref, w3t_ref, bias_ref, out_ref):
    """One batch tile of D's forward pass."""
    # Unpack the fused bias vector (static, lane-aligned slices).
    b1 = bias_ref[:, 0:H1]                       # (1, 512) f32
    b2 = bias_ref[:, H1:H1 + H2]                 # (1, 256) f32
    b3 = bias_ref[:, H1 + H2:H1 + H2 + OUT_DIM]  # (1, 1)   f32

    def leaky_relu(h):
        return jnp.where(h > 0, h, NEG_SLOPE * h)

    x = x_ref[...]                               # (TILE_B, 784) f32

    # Layers 1-2: bf16 operands on the MXU, f32 accumulation, f32 bias add.
    h = jnp.dot(x.astype(jnp.bfloat16), w1_ref[...],
                preferred_element_type=jnp.float32) + b1
    h = leaky_relu(h)
    h = jnp.dot(h.astype(jnp.bfloat16), w2_ref[...],
                preferred_element_type=jnp.float32) + b2
    h = leaky_relu(h)

    # Layer 3 (256 -> 1): elementwise multiply + lane reduction (VPU + XLU)
    # avoids an N=1 MXU matmul.
    logit = jnp.sum(h * w3t_ref[...].astype(jnp.float32),
                    axis=-1, keepdims=True) + b3          # (TILE_B, 1)

    # Tanh (EUP) then map [-1, 1] -> [0, 1].
    out_ref[...] = ((jnp.tanh(logit) + 1.0) * 0.5).astype(out_ref.dtype)


def discriminator_forward(x, ws_bf16, bias_packed, tile_b=None):
    """x: (B, 784) f32 -> (B, 1) f32 in [0, 1]."""
    w1, w2, w3t = ws_bf16
    batch = x.shape[0]
    if tile_b is None:
        tile_b = min(MAX_TILE_B, _round_up(batch, 8))
    tile_b = _round_up(tile_b, 8)

    padded = int(pl.cdiv(batch, tile_b)) * tile_b
    if padded != batch:
        x = jnp.pad(x, ((0, padded - batch), (0, 0)))

    out = pl.pallas_call(
        _discriminator_kernel,
        out_shape=jax.ShapeDtypeStruct((padded, OUT_DIM), jnp.float32),
        grid_spec=pltpu.PrefetchScalarGridSpec(
            num_scalar_prefetch=0,
            grid=(padded // tile_b,),
            in_specs=[
                pl.BlockSpec((tile_b, IN_DIM), lambda i: (i, 0)),        # batch tile
                pl.BlockSpec((IN_DIM, H1), lambda i: (0, 0)),            # resident W1
                pl.BlockSpec((H1, H2), lambda i: (0, 0)),                # resident W2
                pl.BlockSpec((1, H2), lambda i: (0, 0)),                 # resident W3^T
                pl.BlockSpec((1, H1 + H2 + OUT_DIM), lambda i: (0, 0)),  # packed biases
            ],
            out_specs=pl.BlockSpec((tile_b, OUT_DIM), lambda i: (i, 0)),
        ),
        compiler_params=pltpu.CompilerParams(
            dimension_semantics=("parallel",),
        ),
    )(x, w1, w2, w3t, bias_packed)
    return out[:batch]


def init_params(key):
    """PyTorch Linear default init: U(-1/sqrt(fan_in), +1/sqrt(fan_in)) for W and b.
    Weights stored (in, out) so the kernel computes x @ W (== x @ W_pt.T).
    Layer 3's weight is stored transposed as (1, 256) for the reduce path."""
    keys = jax.random.split(key, 6)
    shapes = [(IN_DIM, H1), (H1, H2), (H2, OUT_DIM)]
    ws_f32, bs = [], []
    for li, (fan_in, fan_out) in enumerate(shapes):
        bound = float(fan_in) ** -0.5
        w = jax.random.uniform(keys[2 * li], (fan_in, fan_out), jnp.float32,
                               -bound, bound)
        b = jax.random.uniform(keys[2 * li + 1], (1, fan_out), jnp.float32,
                               -bound, bound)
        ws_f32.append(w)
        bs.append(b)
    bias_packed = jnp.concatenate(bs, axis=1)            # (1, 769) f32
    w3t_f32 = ws_f32[2].T                                # (1, 256)
    ws_kernel_bf16 = (ws_f32[0].astype(jnp.bfloat16),
                      ws_f32[1].astype(jnp.bfloat16),
                      w3t_f32.astype(jnp.bfloat16))
    ws_ref_f32 = (ws_f32[0], ws_f32[1], w3t_f32)
    return ws_kernel_bf16, bias_packed, ws_ref_f32


def _unpack_bias(bias_packed):
    return (bias_packed[:, 0:H1],
            bias_packed[:, H1:H1 + H2],
            bias_packed[:, H1 + H2:H1 + H2 + OUT_DIM])


def reference_forward_bf16(x, ws_bf16, bias_packed):
    """Pure-JAX reference doing the same bf16-weight / f32-accumulate math."""
    w1, w2, w3t = ws_bf16
    b1, b2, b3 = _unpack_bias(bias_packed)
    lrelu = lambda h: jnp.where(h > 0, h, NEG_SLOPE * h)
    h = lrelu(jnp.dot(x.astype(jnp.bfloat16), w1,
                      preferred_element_type=jnp.float32) + b1)
    h = lrelu(jnp.dot(h.astype(jnp.bfloat16), w2,
                      preferred_element_type=jnp.float32) + b2)
    logit = jnp.sum(h * w3t.astype(jnp.float32), axis=-1, keepdims=True) + b3
    return (jnp.tanh(logit) + 1.0) * 0.5


def reference_forward_f32(x, ws_f32, bias_packed):
    """Full-precision reference (matches the PyTorch module's math)."""
    w1, w2, w3t = ws_f32
    b1, b2, b3 = _unpack_bias(bias_packed)
    lrelu = lambda h: jnp.where(h > 0, h, NEG_SLOPE * h)
    h = lrelu(x @ w1 + b1)
    h = lrelu(h @ w2 + b2)
    logit = jnp.sum(h * w3t, axis=-1, keepdims=True) + b3
    return (jnp.tanh(logit) + 1.0) * 0.5


if __name__ == "__main__":
    key = jax.random.PRNGKey(0)
    k_params, k_x = jax.random.split(key)

    ws_bf16, bias_packed, ws_f32 = init_params(k_params)

    # Small, non-multiple-of-tile batch to exercise padding + a multi-step grid.
    batch = 20
    x = jax.random.uniform(k_x, (batch, IN_DIM), jnp.float32)  # fake images in [0, 1]

    out = discriminator_forward(x, ws_bf16, bias_packed, tile_b=8)
    out = jax.block_until_ready(out)
    assert out.shape == (batch, OUT_DIM), out.shape

    ref = reference_forward_bf16(x, ws_bf16, bias_packed)
    assert jnp.allclose(out, ref, atol=1e-3, rtol=1e-3), "mismatch vs bf16 reference"

    ref_f32 = reference_forward_f32(x, ws_f32, bias_packed)
    assert jnp.allclose(out, ref_f32, atol=3e-2, rtol=3e-2), "mismatch vs f32 reference"

    assert bool(jnp.all((out >= 0.0) & (out <= 1.0))), "output not in [0, 1]"

    print("KERNEL_OK")
</pallas_src>

<mosaic_0001>
module attributes {stable_mosaic.version = 11 : i64} {
  func.func @_discriminator_kernel(%arg0: i32, %arg1: memref<8x784xf32, #tpu.memory_space<vmem>>, %arg2: memref<784x512xbf16, #tpu.memory_space<vmem>>, %arg3: memref<512x256xbf16, #tpu.memory_space<vmem>>, %arg4: memref<1x256xbf16, #tpu.memory_space<vmem>>, %arg5: memref<1x769xf32, #tpu.memory_space<vmem>>, %arg6: memref<8x1xf32, #tpu.memory_space<vmem>>) attributes {dimension_semantics = [#tpu.dimension_semantics<parallel>], iteration_bounds = array<i64: 3>, scalar_prefetch = 0 : i64, scratch_operands = 0 : i64, tpu.core_type = #tpu.core_type<tc>, window_params = [{transform_indices = @transform_0, window_bounds = array<i64: 8, 784>}, {pipeline_mode = #tpu.pipeline_mode<synchronous>, transform_indices = @transform_1, window_bounds = array<i64: 784, 512>}, {pipeline_mode = #tpu.pipeline_mode<synchronous>, transform_indices = @transform_2, window_bounds = array<i64: 512, 256>}, {pipeline_mode = #tpu.pipeline_mode<synchronous>, transform_indices = @transform_3, window_bounds = array<i64: 1, 256>}, {pipeline_mode = #tpu.pipeline_mode<synchronous>, transform_indices = @transform_4, window_bounds = array<i64: 1, 769>}, {transform_indices = @transform_5, window_bounds = array<i64: 8, 1>}]} {
    %c0 = arith.constant 0 : index
    %c0_0 = arith.constant 0 : index
    %0 = vector.load %arg5[%c0, %c0_0] : memref<1x769xf32, #tpu.memory_space<vmem>>, vector<1x512xf32>
    %c0_1 = arith.constant 0 : index
    %c512 = arith.constant 512 : index
    %1 = vector.load %arg5[%c0_1, %c512] : memref<1x769xf32, #tpu.memory_space<vmem>>, vector<1x256xf32>
    %c0_2 = arith.constant 0 : index
    %c768 = arith.constant 768 : index
    %2 = vector.load %arg5[%c0_2, %c768] : memref<1x769xf32, #tpu.memory_space<vmem>>, vector<1x1xf32>
    %c0_3 = arith.constant 0 : index
    %c0_4 = arith.constant 0 : index
    %3 = vector.load %arg1[%c0_3, %c0_4] : memref<8x784xf32, #tpu.memory_space<vmem>>, vector<8x784xf32>
    %4 = arith.truncf %3 : vector<8x784xf32> to vector<8x784xbf16>
    %c0_5 = arith.constant 0 : index
    %c0_6 = arith.constant 0 : index
    %5 = vector.load %arg2[%c0_5, %c0_6] : memref<784x512xbf16, #tpu.memory_space<vmem>>, vector<784x512xbf16>
    %cst = arith.constant dense<0.000000e+00> : vector<8x512xf32>
    %6 = tpu.matmul %4, %5, %cst {dimension_numbers = #tpu.dot_dimension_numbers<[1], [0], [0], [1], [0, 0, 1, 1], [], []>} : vector<8x784xbf16>, vector<784x512xbf16>, vector<8x512xf32> -> vector<8x512xf32>
    %7 = vector.broadcast %0 : vector<1x512xf32> to vector<8x512xf32>
    %8 = arith.addf %6, %7 : vector<8x512xf32>
    %cst_7 = arith.constant 0.000000e+00 : f32
    %9 = vector.broadcast %cst_7 : f32 to vector<8x512xf32>
    %10 = arith.cmpf ogt, %8, %9 : vector<8x512xf32>
    %cst_8 = arith.constant 2.000000e-01 : f32
    %11 = vector.broadcast %cst_8 : f32 to vector<8x512xf32>
    %12 = arith.mulf %11, %8 : vector<8x512xf32>
    %13 = arith.select %10, %8, %12 : vector<8x512xi1>, vector<8x512xf32>
    %14 = arith.truncf %13 : vector<8x512xf32> to vector<8x512xbf16>
    %c0_9 = arith.constant 0 : index
    %c0_10 = arith.constant 0 : index
    %15 = vector.load %arg3[%c0_9, %c0_10] : memref<512x256xbf16, #tpu.memory_space<vmem>>, vector<512x256xbf16>
    %cst_11 = arith.constant dense<0.000000e+00> : vector<8x256xf32>
    %16 = tpu.matmul %14, %15, %cst_11 {dimension_numbers = #tpu.dot_dimension_numbers<[1], [0], [0], [1], [0, 0, 1, 1], [], []>} : vector<8x512xbf16>, vector<512x256xbf16>, vector<8x256xf32> -> vector<8x256xf32>
    %17 = vector.broadcast %1 : vector<1x256xf32> to vector<8x256xf32>
    %18 = arith.addf %16, %17 : vector<8x256xf32>
    %cst_12 = arith.constant 0.000000e+00 : f32
    %19 = vector.broadcast %cst_12 : f32 to vector<8x256xf32>
    %20 = arith.cmpf ogt, %18, %19 : vector<8x256xf32>
    %cst_13 = arith.constant 2.000000e-01 : f32
    %21 = vector.broadcast %cst_13 : f32 to vector<8x256xf32>
    %22 = arith.mulf %21, %18 : vector<8x256xf32>
    %23 = arith.select %20, %18, %22 : vector<8x256xi1>, vector<8x256xf32>
    %c0_14 = arith.constant 0 : index
    %c0_15 = arith.constant 0 : index
    %24 = vector.load %arg4[%c0_14, %c0_15] : memref<1x256xbf16, #tpu.memory_space<vmem>>, vector<1x256xbf16>
    %25 = arith.extf %24 : vector<1x256xbf16> to vector<1x256xf32>
    %26 = vector.broadcast %25 : vector<1x256xf32> to vector<8x256xf32>
    %27 = arith.mulf %23, %26 : vector<8x256xf32>
    %cst_16 = arith.constant dense<0.000000e+00> : vector<8xf32>
    %28 = vector.multi_reduction <add>, %27, %cst_16 [1] : vector<8x256xf32> to vector<8xf32>
    %29 = vector.shape_cast %28 : vector<8xf32> to vector<8x1xf32>
    %30 = vector.broadcast %2 : vector<1x1xf32> to vector<8x1xf32>
    %31 = arith.addf %29, %30 : vector<8x1xf32>
    %32 = math.tanh %31 : vector<8x1xf32>
    %cst_17 = arith.constant 1.000000e+00 : f32
    %33 = vector.broadcast %cst_17 : f32 to vector<8x1xf32>
    %34 = arith.addf %32, %33 : vector<8x1xf32>
    %cst_18 = arith.constant 5.000000e-01 : f32
    %35 = vector.broadcast %cst_18 : f32 to vector<8x1xf32>
    %36 = arith.mulf %34, %35 : vector<8x1xf32>
    %c0_19 = arith.constant 0 : index
    %c0_20 = arith.constant 0 : index
    %37 = vector.load %arg6[%c0_19, %c0_20] : memref<8x1xf32, #tpu.memory_space<vmem>>, vector<8x1xf32>
    tpu.vector_store %arg6[%c0_19, %c0_20], %36 {strides = array<i32>} : memref<8x1xf32, #tpu.memory_space<vmem>>, vector<8x1xf32>,
    return
  }
  func.func @transform_0(%arg0: i32) -> (i32, i32) {
    %c0_i32 = arith.constant 0 : i32
    %c0_i32_0 = arith.constant 0 : i32
    return %arg0, %c0_i32 : i32, i32
  }
  func.func @transform_1(%arg0: i32) -> (i32, i32) {
    %c0_i32 = arith.constant 0 : i32
    %c0_i32_0 = arith.constant 0 : i32
    %c0_i32_1 = arith.constant 0 : i32
    return %c0_i32, %c0_i32_0 : i32, i32
  }
  func.func @transform_2(%arg0: i32) -> (i32, i32) {
    %c0_i32 = arith.constant 0 : i32
    %c0_i32_0 = arith.constant 0 : i32
    %c0_i32_1 = arith.constant 0 : i32
    return %c0_i32, %c0_i32_0 : i32, i32
  }
  func.func @transform_3(%arg0: i32) -> (i32, i32) {
    %c0_i32 = arith.constant 0 : i32
    %c0_i32_0 = arith.constant 0 : i32
    %c0_i32_1 = arith.constant 0 : i32
    return %c0_i32, %c0_i32_0 : i32, i32
  }
  func.func @transform_4(%arg0: i32) -> (i32, i32) {
    %c0_i32 = arith.constant 0 : i32
    %c0_i32_0 = arith.constant 0 : i32
    %c0_i32_1 = arith.constant 0 : i32
    return %c0_i32, %c0_i32_0 : i32, i32
  }
  func.func @transform_5(%arg0: i32) -> (i32, i32) {
    %c0_i32 = arith.constant 0 : i32
    %c0_i32_0 = arith.constant 0 : i32
    return %arg0, %c0_i32 : i32, i32
  }
}

</mosaic_0001>

<llo_original>
// kernel: tpu_custom_call.1
$region0: #{tpu_custom_call.1}
  #allocation0 [shape = 'u32[]', space=smem, size = 0x4, offset = 0x4, fixed_abs, tag = 'smem constant byte address 0x4 - core index']
  #allocation1 [shape = 'u32[72,128]{1,0:T(1,128)}', space=vmem, size = 0x9000, scoped, tag = 'internal scratch']
  %s0 = inlined_call_operand.hbm [shape: f32[24,784], index: 0, kind: input, shape index: {}]
  %s1 = inlined_call_operand.hbm [shape: bf16[784,512], index: 1, kind: input, shape index: {}]
  %s2 = inlined_call_operand.hbm [shape: bf16[512,256], index: 2, kind: input, shape index: {}]
  %s3 = inlined_call_operand.vmem [shape: bf16[1,256], index: 3, kind: input, shape index: {}]
  %s4 = inlined_call_operand.hbm [shape: f32[1,769], index: 4, kind: input, shape index: {}]
  %s5 = inlined_call_operand.vmem [shape: f32[24,1], index: 5, kind: output, shape index: {}]
  %s6 = sld [smem:[#allocation0]]
  $region69: #{tpu_custom_call.1} parent=0
    _
  %s8 = ssub.s32 1, %s6
  %s9 = scalar_select 0, %s8, %s6
  $region1: #{tpu_custom_call.1} parent=0
    #allocation2 [shape = 'u8[57344]{0}', space=vmem, size = 0xe000, scoped, tag = 'input window, operand 0']
    #allocation3 [shape = 's32[2]{0}', space=sflag, size = 0x8, scoped, tag = 'scoped memory for tpu_custom_call.1']
    #allocation4 [shape = 'u8[802816]{0}', space=vmem, size = 0xc4000, scoped, tag = 'input window, operand 1, single buffered']
    #allocation5 [shape = 's32[1]{0}', space=sflag, size = 0x4, scoped, tag = 'scoped memory for tpu_custom_call.1']
    #allocation6 [shape = 'u8[262144]{0}', space=vmem, size = 0x40000, scoped, tag = 'input window, operand 2, single buffered']
    #allocation7 [shape = 'u8[3584]{0}', space=vmem, size = 0x1000, scoped, tag = 'input window, operand 4, single buffered']
    #allocation8 [shape = 's32[1]{0}', space=sflag, size = 0x4, scoped, tag = 'scoped memory for tpu_custom_call.1']
    %10 = vsyncpa [#allocation3], 0
    %s11 = scalar_lea.sflag [#allocation3], 1
    %12 = vsyncpa %s11, 0
    %13 = vsyncpa [#allocation5], 0
    %14 = vsyncpa [#allocation8], 0
    loop: start=0, step=1, limit=5
    $region2: #{tpu_custom_call.1} parent=1 // loop_pre_header
      _
    $region3: #{tpu_custom_call.1} parent=1 // loop_header
      %s16 = sphi 0, %s20
      %p17 = scmp.ge.s32.totalorder %s16, 5
      %s26 = sphi 0, %s28
      %s29 = sphi 0, %s26
      %s30 = sphi 0, %s29
      %s46 = sphi 0, %s30
      %s50 = sphi 0, %s50
      %s52 = sphi 0, %s50
      %s53 = sphi 0, %s52
      %s67 = sphi 0, %s53
      %s71 = sphi 0, %s71
      %s73 = sphi 0, %s71
      %s74 = sphi 0, %s73
      %s88 = sphi 0, %s74
      %s92 = sphi 0, %s92
      %s94 = sphi 0, %s92
      %s95 = sphi 0, %s94
      %s109 = sphi 0, %s95
      %s113 = sphi 0, %s113
      %s115 = sphi 0, %s113
      %s116 = sphi 0, %s115
      %s130 = sphi 0, %s116
      %s136 = sphi 0, %s138
      %s139 = sphi 0, %s136
      %s140 = sphi 0, %s139
      %s156 = sphi 0, %s140
    $region4: #{tpu_custom_call.1} parent=1 // loop_header_branch
      %19 = sbr.rel (%p17) target = $region8
    $region5: #{tpu_custom_call.1} parent=1 // loop_body
      %s21 = ssub.s32 %s16, 1
      %s22 = ssub.s32 %s16, 2
      %s23 = sadd.s32 %s16, 1
      %s24 = ssub.s32 %s16, %s23
      %p25 = scmp.eq.s32.totalorder %s24, 0
      %s27 = sadd.s32 %s26, 1
      %s28 = scalar_select %p25, %s26, %s27
      %p31 = pneg %p25
      %p32 = scmp.eq.s32.totalorder %s16, 2
      %p33 = por %p31, %p32
      %p34 = scmp.ne.s32.totalorder %s26, %s29
      %p35 = scmp.eq.s32.totalorder %s16, 0
      %p36 = por %p34, %p35
      %p37 = scmp.ne.s32.totalorder %s26, %s29
      %p38 = scmp.eq.s32.totalorder %s21, 2
      %p39 = por %p37, %p38
      %p40 = scmp.ne.s32.totalorder %s29, %s30
      %p41 = scmp.eq.s32.totalorder %s21, 0
      %p42 = por %p40, %p41
      %p43 = scmp.ne.s32.totalorder %s29, %s30
      %p44 = scmp.eq.s32.totalorder %s22, 2
      %p45 = por %p43, %p44
      %p47 = scmp.ne.s32.totalorder %s30, %s46
      %p48 = scmp.eq.s32.totalorder %s22, 0
      %p49 = por %p47, %p48
      %s51 = sadd.s32 %s50, 1
      %p54 = scmp.eq.s32.totalorder %s16, 2
      %p55 = scmp.ne.s32.totalorder %s50, %s52
      %p56 = scmp.eq.s32.totalorder %s16, 0
      %p57 = por %p55, %p56
      %p58 = scmp.ne.s32.totalorder %s50, %s52
      %p59 = scmp.eq.s32.totalorder %s21, 2
      %p60 = por %p58, %p59
      %p61 = scmp.ne.s32.totalorder %s52, %s53
      %p62 = scmp.eq.s32.totalorder %s21, 0
      %p63 = por %p61, %p62
      %p64 = scmp.ne.s32.totalorder %s52, %s53
      %p65 = scmp.eq.s32.totalorder %s22, 2
      %p66 = por %p64, %p65
      %p68 = scmp.ne.s32.totalorder %s53, %s67
      %p69 = scmp.eq.s32.totalorder %s22, 0
      %p70 = por %p68, %p69
      %s72 = sadd.s32 %s71, 1
      %p75 = scmp.eq.s32.totalorder %s16, 2
      %p76 = scmp.ne.s32.totalorder %s71, %s73
      %p77 = scmp.eq.s32.totalorder %s16, 0
      %p78 = por %p76, %p77
      %p79 = scmp.ne.s32.totalorder %s71, %s73
      %p80 = scmp.eq.s32.totalorder %s21, 2
      %p81 = por %p79, %p80
      %p82 = scmp.ne.s32.totalorder %s73, %s74
      %p83 = scmp.eq.s32.totalorder %s21, 0
      %p84 = por %p82, %p83
      %p85 = scmp.ne.s32.totalorder %s73, %s74
      %p86 = scmp.eq.s32.totalorder %s22, 2
      %p87 = por %p85, %p86
      %p89 = scmp.ne.s32.totalorder %s74, %s88
      %p90 = scmp.eq.s32.totalorder %s22, 0
      %p91 = por %p89, %p90
      %s93 = sadd.s32 %s92, 1
      %p96 = scmp.eq.s32.totalorder %s16, 2
      %p97 = scmp.ne.s32.totalorder %s92, %s94
      %p98 = scmp.eq.s32.totalorder %s16, 0
      %p99 = por %p97, %p98
      %p100 = scmp.ne.s32.totalorder %s92, %s94
      %p101 = scmp.eq.s32.totalorder %s21, 2
      %p102 = por %p100, %p101
      %p103 = scmp.ne.s32.totalorder %s94, %s95
      %p104 = scmp.eq.s32.totalorder %s21, 0
      %p105 = por %p103, %p104
      %p106 = scmp.ne.s32.totalorder %s94, %s95
      %p107 = scmp.eq.s32.totalorder %s22, 2
      %p108 = por %p106, %p107
      %p110 = scmp.ne.s32.totalorder %s95, %s109
      %p111 = scmp.eq.s32.totalorder %s22, 0
      %p112 = por %p110, %p111
      %s114 = sadd.s32 %s113, 1
      %p117 = scmp.eq.s32.totalorder %s16, 2
      %p118 = scmp.ne.s32.totalorder %s113, %s115
      %p119 = scmp.eq.s32.totalorder %s16, 0
      %p120 = por %p118, %p119
      %p121 = scmp.ne.s32.totalorder %s113, %s115
      %p122 = scmp.eq.s32.totalorder %s21, 2
      %p123 = por %p121, %p122
      %p124 = scmp.ne.s32.totalorder %s115, %s116
      %p125 = scmp.eq.s32.totalorder %s21, 0
      %p126 = por %p124, %p125
      %p127 = scmp.ne.s32.totalorder %s115, %s116
      %p128 = scmp.eq.s32.totalorder %s22, 2
      %p129 = por %p127, %p128
      %p131 = scmp.ne.s32.totalorder %s116, %s130
      %p132 = scmp.eq.s32.totalorder %s22, 0
      %p133 = por %p131, %p132
      %s134 = ssub.s32 %s16, %s23
      %p135 = scmp.eq.s32.totalorder %s134, 0
      %s137 = sadd.s32 %s136, 1
      %s138 = scalar_select %p135, %s136, %s137
      %p141 = pneg %p135
      %p142 = scmp.eq.s32.totalorder %s16, 2
      %p143 = por %p141, %p142
      %p144 = scmp.ne.s32.totalorder %s136, %s139
      %p145 = scmp.eq.s32.totalorder %s16, 0
      %p146 = por %p144, %p145
      %p147 = scmp.ne.s32.totalorder %s136, %s139
      %p148 = scmp.eq.s32.totalorder %s21, 2
      %p149 = por %p147, %p148
      %p150 = scmp.ne.s32.totalorder %s139, %s140
      %p151 = scmp.eq.s32.totalorder %s21, 0
      %p152 = por %p150, %p151
      %p153 = scmp.ne.s32.totalorder %s139, %s140
      %p154 = scmp.eq.s32.totalorder %s22, 2
      %p155 = por %p153, %p154
      %p157 = scmp.ne.s32.totalorder %s140, %s156
      %p158 = scmp.eq.s32.totalorder %s22, 0
      %p159 = por %p157, %p158
      %p160 = scmp.le.s32.totalorder 1, %s16
      %p161 = scmp.lt.s32.totalorder %s16, 4
      %p162 = pnand %p160, %p161
      %p163 = pneg %p162
      // Predicated region
      $region9: #{tpu_custom_call.1} parent=5 // pred_check
        _
      $region10: #{tpu_custom_call.1} parent=5 // pred_check_branch
        %165 = sbr.rel (%p162) target = $region12
      $region11: #{tpu_custom_call.1} parent=5 // pred_region
        %s166 = ssub.s32 %s16, 1
        // Predicated region
        $region13: #{tpu_custom_call.1} parent=11 // pred_check
          %p167 = pneg %p63
        $region14: #{tpu_custom_call.1} parent=11 // pred_check_branch
          %169 = sbr.rel (%p167) target = $region16
        $region15: #{tpu_custom_call.1} parent=11 // pred_region
          %171 = vsyncadd [#allocation5], 0
          %s172 = sshll.u32 %s1, 4
          %s173 = int_to_ptr.hbm [resolvable:$true] %s172
          %s174 = sshll.u32 [#allocation4], 4
          %s175 = int_to_ptr.vmem [resolvable:$true] %s174
          %180 = dma.hbm_to_vmem [thread:$0]  %s173, 25088, %s175, [#allocation5], 256, 256, 16
        $region16: #{tpu_custom_call.1} parent=11 // pred_fallthru
          _
        // Predicated region
        $region17: #{tpu_custom_call.1} parent=11 // pred_check
          %p181 = pneg %p84
        $region18: #{tpu_custom_call.1} parent=11 // pred_check_branch
          %183 = sbr.rel (%p181) target = $region20
        $region19: #{tpu_custom_call.1} parent=11 // pred_region
          %185 = vsyncadd [#allocation5], 0
          %s186 = sshll.u32 %s2, 4
          %s187 = int_to_ptr.hbm [resolvable:$true] %s186
          %s188 = sshll.u32 [#allocation6], 4
          %s189 = int_to_ptr.vmem [resolvable:$true] %s188
          %194 = dma.hbm_to_vmem [thread:$0]  %s187, 8192, %s189, [#allocation5], 128, 128, 8
        $region20: #{tpu_custom_call.1} parent=11 // pred_fallthru
          _
        // Predicated region
        $region21: #{tpu_custom_call.1} parent=11 // pred_check
          %p195 = pneg %p105
        $region22: #{tpu_custom_call.1} parent=11 // pred_check_branch
          %197 = sbr.rel (%p195) target = $region24
        $region23: #{tpu_custom_call.1} parent=11 // pred_region
          _
        $region24: #{tpu_custom_call.1} parent=11 // pred_fallthru
          _
        // Predicated region
        $region25: #{tpu_custom_call.1} parent=11 // pred_check
          %p198 = pneg %p126
        $region26: #{tpu_custom_call.1} parent=11 // pred_check_branch
          %200 = sbr.rel (%p198) target = $region28
        $region27: #{tpu_custom_call.1} parent=11 // pred_region
          %202 = vsyncadd [#allocation8], 0
          %s204 = sshll.u32 %s4, 4
          %s205 = int_to_ptr.hbm [resolvable:$true] %s204
          %s206 = sshll.u32 [#allocation7], 4
          %s207 = int_to_ptr.vmem [resolvable:$true] %s206
          %209 = dma.hbm_to_vmem [thread:$0]  %s205, 112, %s207, [#allocation8]
        $region28: #{tpu_custom_call.1} parent=11 // pred_fallthru
          _
      $region12: #{tpu_custom_call.1} parent=5 // pred_fallthru
        _
      %p210 = scmp.lt.s32.totalorder %s16, 3
      // Predicated region
      $region29: #{tpu_custom_call.1} parent=5 // pred_check
        %p211 = pneg %p210
      $region30: #{tpu_custom_call.1} parent=5 // pred_check_branch
        %213 = sbr.rel (%p211) target = $region32
      $region31: #{tpu_custom_call.1} parent=5 // pred_region
        // Predicated region
        $region33: #{tpu_custom_call.1} parent=31 // pred_check
          %p214 = pneg %p36
        $region34: #{tpu_custom_call.1} parent=31 // pred_check_branch
          %216 = sbr.rel (%p214) target = $region36
        $region35: #{tpu_custom_call.1} parent=31 // pred_region
          %s217 = sand.u32 %s26, 1
          %s218 = scalar_lea.sflag [#allocation3], %s217
          %s219 = sand.u32 %s26, 1
          %s220 = smul.addr %s219, 56
          %s221 = scalar_lea.vmem [#allocation2], %s220
          %223 = vsyncadd %s218, 0
          %s224 = smul.addr %s16, 7
          %s225 = smul.addr %s224, 8
          %s226 = scalar_lea.hbm %s0, %s225
          %s228 = sshll.u32 %s226, 4
          %s229 = int_to_ptr.hbm [resolvable:$true] %s228
          %s230 = sshll.u32 %s221, 4
          %s231 = int_to_ptr.vmem [resolvable:$true] %s230
          %233 = dma.hbm_to_vmem [thread:$0]  %s229, 896, %s231, %s218
        $region36: #{tpu_custom_call.1} parent=31 // pred_fallthru
          _
      $region32: #{tpu_custom_call.1} parent=5 // pred_fallthru
        _
      %p234 = scmp.le.s32.totalorder 1, %s16
      %p235 = scmp.lt.s32.totalorder %s16, 4
      %p236 = pnand %p234, %p235
      %p237 = pneg %p236
      // Predicated region
      $region37: #{tpu_custom_call.1} parent=5 // pred_check
        _
      $region38: #{tpu_custom_call.1} parent=5 // pred_check_branch
        %239 = sbr.rel (%p236) target = $region40
      $region39: #{tpu_custom_call.1} parent=5 // pred_region
        %s240 = ssub.s32 %s16, 1
        %s241 = sand.u32 %s29, 1
        %s242 = scalar_lea.sflag [#allocation3], %s241
        %s243 = sand.u32 %s29, 1
        %s244 = smul.addr %s243, 56
        %s245 = scalar_lea.vmem [#allocation2], %s244
        // Predicated region
        $region41: #{tpu_custom_call.1} parent=39 // pred_check
          %p246 = pneg %p42
        $region42: #{tpu_custom_call.1} parent=39 // pred_check_branch
          %248 = sbr.rel (%p246) target = $region44
        $region43: #{tpu_custom_call.1} parent=39 // pred_region
          %250 = dma.done %s242, 896
        $region44: #{tpu_custom_call.1} parent=39 // pred_fallthru
          _
        // Predicated region
        $region45: #{tpu_custom_call.1} parent=39 // pred_check
          %p251 = pneg %p63
        $region46: #{tpu_custom_call.1} parent=39 // pred_check_branch
          %253 = sbr.rel (%p251) target = $region48
        $region47: #{tpu_custom_call.1} parent=39 // pred_region
          %255 = dma.done [#allocation5], 25088
        $region48: #{tpu_custom_call.1} parent=39 // pred_fallthru
          _
        // Predicated region
        $region49: #{tpu_custom_call.1} parent=39 // pred_check
          %p256 = pneg %p84
        $region50: #{tpu_custom_call.1} parent=39 // pred_check_branch
          %258 = sbr.rel (%p256) target = $region52
        $region51: #{tpu_custom_call.1} parent=39 // pred_region
          %260 = dma.done [#allocation5], 8192
        $region52: #{tpu_custom_call.1} parent=39 // pred_fallthru
          _
        // Predicated region
        $region53: #{tpu_custom_call.1} parent=39 // pred_check
          %p261 = pneg %p126
        $region54: #{tpu_custom_call.1} parent=39 // pred_check_branch
          %263 = sbr.rel (%p261) target = $region56
        $region55: #{tpu_custom_call.1} parent=39 // pred_region
          %265 = dma.done [#allocation8], 112
        $region56: #{tpu_custom_call.1} parent=39 // pred_fallthru
          _
        %s266 = sand.u32 %s29, 1
        %s267 = scalar_lea.sflag [#allocation3], %s266
        %s268 = sand.u32 %s29, 1
        %s269 = smul.addr %s268, 56
        %s270 = scalar_lea.vmem [#allocation2], %s269
        %p271 = pneg %p42
        %p272 = pneg %p39
        %p273 = pneg %p63
        %p274 = pneg %p60
        %p275 = pneg %p84
        %p276 = pneg %p81
        %p277 = pneg %p105
        %p278 = pneg %p102
        %p279 = pneg %p126
        %p280 = pneg %p123
        %p281 = pneg %p152
        %p282 = pneg %p149
        %p283 = scmp.lt.s32.totalorder %s21, 2
        %s284 = scalar_select %p283, %s21, 2
        %s285 = smul.addr %s284, 8
        %s286 = scalar_lea.vmem %s5, %s285
        %p287 = scmp.lt.s32.totalorder %s21, 2
        %s288 = scalar_select %p287, %s21, 2
        %s289 = smul.addr %s288, 8
        %s290 = scalar_lea.vmem %s5, %s289
        %v292 = vld [vmem:[#allocation7] sm:$0xf]
        %v293 = vld [vmem:[#allocation7 + $0x4] sm:$0x3]
        %v294 = vld [vmem:[#allocation7 + $0x6] sm:$0x1]
        %v295 = vld [vmem:[%s245] sm:$0xff]
        %v296 = vld [vmem:[%s245 + $0x8] sm:$0xff]
        %v297 = vld [vmem:[%s245 + $0x10] sm:$0xff]
        %v298 = vld [vmem:[%s245 + $0x18] sm:$0xff]
        %v299 = vld [vmem:[%s245 + $0x20] sm:$0xff]
        %v300 = vld [vmem:[%s245 + $0x28] sm:$0xff]
        %v301 = vld [vmem:[%s245 + $0x30] sm:$0xff]
        %v302 = vpack.c.bf16 %v295, %v295
        %v303 = vpack.c.bf16 %v296, %v296
        %v304 = vpack.c.bf16 %v297, %v297
        %v305 = vpack.c.bf16 %v298, %v298
        %v306 = vpack.c.bf16 %v299, %v299
        %v307 = vpack.c.bf16 %v300, %v300
        %v308 = vpack.c.bf16 %v301, %v301
        %v309 = vld [vmem:[#allocation4] sm:$0xff]
        %v310 = vld [vmem:[#allocation4 + $0x8] sm:$0xff]
        %v311 = vld [vmem:[#allocation4 + $0x10] sm:$0xff]
        %v312 = vld [vmem:[#allocation4 + $0x18] sm:$0xff]
        %v313 = vld [vmem:[#allocation4 + $0x20] sm:$0xff]
        %v314 = vld [vmem:[#allocation4 + $0x28] sm:$0xff]
        %v315 = vld [vmem:[#allocation4 + $0x30] sm:$0xff]
        %v316 = vld [vmem:[#allocation4 + $0x38] sm:$0xff]
        %v317 = vld [vmem:[#allocation4 + $0x40] sm:$0xff]
        %v318 = vld [vmem:[#allocation4 + $0x48] sm:$0xff]
        %v319 = vld [vmem:[#allocation4 + $0x50] sm:$0xff]
        %v320 = vld [vmem:[#allocation4 + $0x58] sm:$0xff]
        %v321 = vld [vmem:[#allocation4 + $0x60] sm:$0xff]
        %v322 = vld [vmem:[#allocation4 + $0x68] sm:$0xff]
        %v323 = vld [vmem:[#allocation4 + $0x70] sm:$0xff]
        %v324 = vld [vmem:[#allocation4 + $0x78] sm:$0xff]
        %v325 = vld [vmem:[#allocation4 + $0x80] sm:$0xff]
        %v326 = vld [vmem:[#allocation4 + $0x88] sm:$0xff]
        %v327 = vld [vmem:[#allocation4 + $0x90] sm:$0xff]
        %v328 = vld [vmem:[#allocation4 + $0x98] sm:$0xff]
        %v329 = vld [vmem:[#allocation4 + $0xa0] sm:$0xff]
        %v330 = vld [vmem:[#allocation4 + $0xa8] sm:$0xff]
        %v331 = vld [vmem:[#allocation4 + $0xb0] sm:$0xff]
        %v332 = vld [vmem:[#allocation4 + $0xb8] sm:$0xff]
        %v333 = vld [vmem:[#allocation4 + $0xc0] sm:$0xff]
        %v334 = vld [vmem:[#allocation4 + $0xc8] sm:$0xff]
        %v335 = vld [vmem:[#allocation4 + $0xd0] sm:$0xff]
        %v336 = vld [vmem:[#allocation4 + $0xd8] sm:$0xff]
        %v337 = vld [vmem:[#allocation4 + $0xe0] sm:$0xff]
        %v338 = vld [vmem:[#allocation4 + $0xe8] sm:$0xff]
        %v339 = vld [vmem:[#allocation4 + $0xf0] sm:$0xff]
        %v340 = vld [vmem:[#allocation4 + $0xf8] sm:$0xff]
        %v341 = vld [vmem:[#allocation4 + $0x100] sm:$0xff]
        %v342 = vld [vmem:[#allocation4 + $0x108] sm:$0xff]
        %v343 = vld [vmem:[#allocation4 + $0x110] sm:$0xff]
        %v344 = vld [vmem:[#allocation4 + $0x118] sm:$0xff]
        %v345 = vld [vmem:[#allocation4 + $0x120] sm:$0xff]
        %v346 = vld [vmem:[#allocation4 + $0x128] sm:$0xff]
        %v347 = vld [vmem:[#allocation4 + $0x130] sm:$0xff]
        %v348 = vld [vmem:[#allocation4 + $0x138] sm:$0xff]
        %v349 = vld [vmem:[#allocation4 + $0x140] sm:$0xff]
        %v350 = vld [vmem:[#allocation4 + $0x148] sm:$0xff]
        %v351 = vld [vmem:[#allocation4 + $0x150] sm:$0xff]
        %v352 = vld [vmem:[#allocation4 + $0x158] sm:$0xff]
        %v353 = vld [vmem:[#allocation4 + $0x160] sm:$0xff]
        %v354 = vld [vmem:[#allocation4 + $0x168] sm:$0xff]
        %v355 = vld [vmem:[#allocation4 + $0x170] sm:$0xff]
        %v356 = vld [vmem:[#allocation4 + $0x178] sm:$0xff]
        %v357 = vld [vmem:[#allocation4 + $0x180] sm:$0xff]
        %v358 = vld [vmem:[#allocation4 + $0x188] sm:$0xff]
        %v359 = vld [vmem:[#allocation4 + $0x190] sm:$0xff]
        %v360 = vld [vmem:[#allocation4 + $0x198] sm:$0xff]
        %v361 = vld [vmem:[#allocation4 + $0x1a0] sm:$0xff]
        %v362 = vld [vmem:[#allocation4 + $0x1a8] sm:$0xff]
        %v363 = vld [vmem:[#allocation4 + $0x1b0] sm:$0xff]
        %v364 = vld [vmem:[#allocation4 + $0x1b8] sm:$0xff]
        %v365 = vld [vmem:[#allocation4 + $0x1c0] sm:$0xff]
        %v366 = vld [vmem:[#allocation4 + $0x1c8] sm:$0xff]
        %v367 = vld [vmem:[#allocation4 + $0x1d0] sm:$0xff]
        %v368 = vld [vmem:[#allocation4 + $0x1d8] sm:$0xff]
        %v369 = vld [vmem:[#allocation4 + $0x1e0] sm:$0xff]
        %v370 = vld [vmem:[#allocation4 + $0x1e8] sm:$0xff]
        %v371 = vld [vmem:[#allocation4 + $0x1f0] sm:$0xff]
        %v372 = vld [vmem:[#allocation4 + $0x1f8] sm:$0xff]
        %v373 = vld [vmem:[#allocation4 + $0x200] sm:$0xff]
        %v374 = vld [vmem:[#allocation4 + $0x208] sm:$0xff]
        %v375 = vld [vmem:[#allocation4 + $0x210] sm:$0xff]
        %v376 = vld [vmem:[#allocation4 + $0x218] sm:$0xff]
        %v377 = vld [vmem:[#allocation4 + $0x220] sm:$0xff]
        %v378 = vld [vmem:[#allocation4 + $0x228] sm:$0xff]
        %v379 = vld [vmem:[#allocation4 + $0x230] sm:$0xff]
        %v380 = vld [vmem:[#allocation4 + $0x238] sm:$0xff]
        %v381 = vld [vmem:[#allocation4 + $0x240] sm:$0xff]
        %v382 = vld [vmem:[#allocation4 + $0x248] sm:$0xff]
        %v383 = vld [vmem:[#allocation4 + $0x250] sm:$0xff]
        %v384 = vld [vmem:[#allocation4 + $0x258] sm:$0xff]
        %v385 = vld [vmem:[#allocation4 + $0x260] sm:$0xff]
        %v386 = vld [vmem:[#allocation4 + $0x268] sm:$0xff]
        %v387 = vld [vmem:[#allocation4 + $0x270] sm:$0xff]
        %v388 = vld [vmem:[#allocation4 + $0x278] sm:$0xff]
        %v389 = vld [vmem:[#allocation4 + $0x280] sm:$0xff]
        %v390 = vld [vmem:[#allocation4 + $0x288] sm:$0xff]
        %v391 = vld [vmem:[#allocation4 + $0x290] sm:$0xff]
        %v392 = vld [vmem:[#allocation4 + $0x298] sm:$0xff]
        %v393 = vld [vmem:[#allocation4 + $0x2a0] sm:$0xff]
        %v394 = vld [vmem:[#allocation4 + $0x2a8] sm:$0xff]
        %v395 = vld [vmem:[#allocation4 + $0x2b0] sm:$0xff]
        %v396 = vld [vmem:[#allocation4 + $0x2b8] sm:$0xff]
        %v397 = vld [vmem:[#allocation4 + $0x2c0] sm:$0xff]
        %v398 = vld [vmem:[#allocation4 + $0x2c8] sm:$0xff]
        %v399 = vld [vmem:[#allocation4 + $0x2d0] sm:$0xff]
        %v400 = vld [vmem:[#allocation4 + $0x2d8] sm:$0xff]
        %v401 = vld [vmem:[#allocation4 + $0x2e0] sm:$0xff]
        %v402 = vld [vmem:[#allocation4 + $0x2e8] sm:$0xff]
        %v403 = vld [vmem:[#allocation4 + $0x2f0] sm:$0xff]
        %v404 = vld [vmem:[#allocation4 + $0x2f8] sm:$0xff]
        %v405 = vld [vmem:[#allocation4 + $0x300] sm:$0xff]
        %v406 = vld [vmem:[#allocation4 + $0x308] sm:$0xff]
        %v407 = vld [vmem:[#allocation4 + $0x310] sm:$0xff]
        %v408 = vld [vmem:[#allocation4 + $0x318] sm:$0xff]
        %v409 = vld [vmem:[#allocation4 + $0x320] sm:$0xff]
        %v410 = vld [vmem:[#allocation4 + $0x328] sm:$0xff]
        %v411 = vld [vmem:[#allocation4 + $0x330] sm:$0xff]
        %v412 = vld [vmem:[#allocation4 + $0x338] sm:$0xff]
        %v413 = vld [vmem:[#allocation4 + $0x340] sm:$0xff]
        %v414 = vld [vmem:[#allocation4 + $0x348] sm:$0xff]
        %v415 = vld [vmem:[#allocation4 + $0x350] sm:$0xff]
        %v416 = vld [vmem:[#allocation4 + $0x358] sm:$0xff]
        %v417 = vld [vmem:[#allocation4 + $0x360] sm:$0xff]
        %v418 = vld [vmem:[#allocation4 + $0x368] sm:$0xff]
        %v419 = vld [vmem:[#allocation4 + $0x370] sm:$0xff]
        %v420 = vld [vmem:[#allocation4 + $0x378] sm:$0xff]
        %v421 = vld [vmem:[#allocation4 + $0x380] sm:$0xff]
        %v422 = vld [vmem:[#allocation4 + $0x388] sm:$0xff]
        %v423 = vld [vmem:[#allocation4 + $0x390] sm:$0xff]
        %v424 = vld [vmem:[#allocation4 + $0x398] sm:$0xff]
        %v425 = vld [vmem:[#allocation4 + $0x3a0] sm:$0xff]
        %v426 = vld [vmem:[#allocation4 + $0x3a8] sm:$0xff]
        %v427 = vld [vmem:[#allocation4 + $0x3b0] sm:$0xff]
        %v428 = vld [vmem:[#allocation4 + $0x3b8] sm:$0xff]
        %v429 = vld [vmem:[#allocation4 + $0x3c0] sm:$0xff]
        %v430 = vld [vmem:[#allocation4 + $0x3c8] sm:$0xff]
        %v431 = vld [vmem:[#allocation4 + $0x3d0] sm:$0xff]
        %v432 = vld [vmem:[#allocation4 + $0x3d8] sm:$0xff]
        %v433 = vld [vmem:[#allocation4 + $0x3e0] sm:$0xff]
        %v434 = vld [vmem:[#allocation4 + $0x3e8] sm:$0xff]
        %v435 = vld [vmem:[#allocation4 + $0x3f0] sm:$0xff]
        %v436 = vld [vmem:[#allocation4 + $0x3f8] sm:$0xff]
        %v437 = vld [vmem:[#allocation4 + $0x400] sm:$0xff]
        %v438 = vld [vmem:[#allocation4 + $0x408] sm:$0xff]
        %v439 = vld [vmem:[#allocation4 + $0x410] sm:$0xff]
        %v440 = vld [vmem:[#allocation4 + $0x418] sm:$0xff]
        %v441 = vld [vmem:[#allocation4 + $0x420] sm:$0xff]
        %v442 = vld [vmem:[#allocation4 + $0x428] sm:$0xff]
        %v443 = vld [vmem:[#allocation4 + $0x430] sm:$0xff]
        %v444 = vld [vmem:[#allocation4 + $0x438] sm:$0xff]
        %v445 = vld [vmem:[#allocation4 + $0x440] sm:$0xff]
        %v446 = vld [vmem:[#allocation4 + $0x448] sm:$0xff]
        %v447 = vld [vmem:[#allocation4 + $0x450] sm:$0xff]
        %v448 = vld [vmem:[#allocation4 + $0x458] sm:$0xff]
        %v449 = vld [vmem:[#allocation4 + $0x460] sm:$0xff]
        %v450 = vld [vmem:[#allocation4 + $0x468] sm:$0xff]
        %v451 = vld [vmem:[#allocation4 + $0x470] sm:$0xff]
        %v452 = vld [vmem:[#allocation4 + $0x478] sm:$0xff]
        %v453 = vld [vmem:[#allocation4 + $0x480] sm:$0xff]
        %v454 = vld [vmem:[#allocation4 + $0x488] sm:$0xff]
        %v455 = vld [vmem:[#allocation4 + $0x490] sm:$0xff]
        %v456 = vld [vmem:[#allocation4 + $0x498] sm:$0xff]
        %v457 = vld [vmem:[#allocation4 + $0x4a0] sm:$0xff]
        %v458 = vld [vmem:[#allocation4 + $0x4a8] sm:$0xff]
        %v459 = vld [vmem:[#allocation4 + $0x4b0] sm:$0xff]
        %v460 = vld [vmem:[#allocation4 + $0x4b8] sm:$0xff]
        %v461 = vld [vmem:[#allocation4 + $0x4c0] sm:$0xff]
        %v462 = vld [vmem:[#allocation4 + $0x4c8] sm:$0xff]
        %v463 = vld [vmem:[#allocation4 + $0x4d0] sm:$0xff]
        %v464 = vld [vmem:[#allocation4 + $0x4d8] sm:$0xff]
        %v465 = vld [vmem:[#allocation4 + $0x4e0] sm:$0xff]
        %v466 = vld [vmem:[#allocation4 + $0x4e8] sm:$0xff]
        %v467 = vld [vmem:[#allocation4 + $0x4f0] sm:$0xff]
        %v468 = vld [vmem:[#allocation4 + $0x4f8] sm:$0xff]
        %v469 = vld [vmem:[#allocation4 + $0x500] sm:$0xff]
        %v470 = vld [vmem:[#allocation4 + $0x508] sm:$0xff]
        %v471 = vld [vmem:[#allocation4 + $0x510] sm:$0xff]
        %v472 = vld [vmem:[#allocation4 + $0x518] sm:$0xff]
        %v473 = vld [vmem:[#allocation4 + $0x520] sm:$0xff]
        %v474 = vld [vmem:[#allocation4 + $0x528] sm:$0xff]
        %v475 = vld [vmem:[#allocation4 + $0x530] sm:$0xff]
        %v476 = vld [vmem:[#allocation4 + $0x538] sm:$0xff]
        %v477 = vld [vmem:[#allocation4 + $0x540] sm:$0xff]
        %v478 = vld [vmem:[#allocation4 + $0x548] sm:$0xff]
        %v479 = vld [vmem:[#allocation4 + $0x550] sm:$0xff]
        %v480 = vld [vmem:[#allocation4 + $0x558] sm:$0xff]
        %v481 = vld [vmem:[#allocation4 + $0x560] sm:$0xff]
        %v482 = vld [vmem:[#allocation4 + $0x568] sm:$0xff]
        %v483 = vld [vmem:[#allocation4 + $0x570] sm:$0xff]
        %v484 = vld [vmem:[#allocation4 + $0x578] sm:$0xff]
        %v485 = vld [vmem:[#allocation4 + $0x580] sm:$0xff]
        %v486 = vld [vmem:[#allocation4 + $0x588] sm:$0xff]
        %v487 = vld [vmem:[#allocation4 + $0x590] sm:$0xff]
        %v488 = vld [vmem:[#allocation4 + $0x598] sm:$0xff]
        %v489 = vld [vmem:[#allocation4 + $0x5a0] sm:$0xff]
        %v490 = vld [vmem:[#allocation4 + $0x5a8] sm:$0xff]
        %v491 = vld [vmem:[#allocation4 + $0x5b0] sm:$0xff]
        %v492 = vld [vmem:[#allocation4 + $0x5b8] sm:$0xff]
        %v493 = vld [vmem:[#allocation4 + $0x5c0] sm:$0xff]
        %v494 = vld [vmem:[#allocation4 + $0x5c8] sm:$0xff]
        %v495 = vld [vmem:[#allocation4 + $0x5d0] sm:$0xff]
        %v496 = vld [vmem:[#allocation4 + $0x5d8] sm:$0xff]
        %v497 = vld [vmem:[#allocation4 + $0x5e0] sm:$0xff]
        %v498 = vld [vmem:[#allocation4 + $0x5e8] sm:$0xff]
        %v499 = vld [vmem:[#allocation4 + $0x5f0] sm:$0xff]
        %v500 = vld [vmem:[#allocation4 + $0x5f8] sm:$0xff]
        %v501 = vld [vmem:[#allocation4 + $0x600] sm:$0xff]
        %v502 = vld [vmem:[#allocation4 + $0x608] sm:$0xff]
        %v503 = vld [vmem:[#allocation4 + $0x610] sm:$0xff]
        %v504 = vld [vmem:[#allocation4 + $0x618] sm:$0xff]
        %v506 = vperm.slane %v292, 0
        %v507 = vperm.slane %v292, 1
        %v508 = vperm.slane %v292, 2
        %v509 = vperm.slane %v292, 3
        %v710 = vunpack.c.l.b16 %v309
        %v711 = vunpack.c.h.b16 %v309
        %v712 = vunpack.c.l.b16 %v310
        %v713 = vunpack.c.h.b16 %v310
        %v714 = vunpack.c.l.b16 %v311
        %v715 = vunpack.c.h.b16 %v311
        %v716 = vunpack.c.l.b16 %v312
        %v717 = vunpack.c.h.b16 %v312
        %v718 = vunpack.c.l.b16 %v313
        %v719 = vunpack.c.h.b16 %v313
        %v720 = vunpack.c.l.b16 %v314
        %v721 = vunpack.c.h.b16 %v314
        %v722 = vunpack.c.l.b16 %v315
        %v723 = vunpack.c.h.b16 %v315
        %v724 = vunpack.c.l.b16 %v316
        %v725 = vunpack.c.h.b16 %v316
        %v726 = vunpack.c.l.b16 %v317
        %v727 = vunpack.c.h.b16 %v317
        %v728 = vunpack.c.l.b16 %v318
        %v729 = vunpack.c.h.b16 %v318
        %v730 = vunpack.c.l.b16 %v319
        %v731 = vunpack.c.h.b16 %v319
        %v732 = vunpack.c.l.b16 %v320
        %v733 = vunpack.c.h.b16 %v320
        %v734 = vunpack.c.l.b16 %v321
        %v735 = vunpack.c.h.b16 %v321
        %v736 = vunpack.c.l.b16 %v322
        %v737 = vunpack.c.h.b16 %v322
        %v738 = vunpack.c.l.b16 %v323
        %v739 = vunpack.c.h.b16 %v323
        %v740 = vunpack.c.l.b16 %v324
        %v741 = vunpack.c.h.b16 %v324
        %v742 = vunpack.c.l.b16 %v325
        %v743 = vunpack.c.h.b16 %v325
        %v744 = vunpack.c.l.b16 %v326
        %v745 = vunpack.c.h.b16 %v326
        %v746 = vunpack.c.l.b16 %v327
        %v747 = vunpack.c.h.b16 %v327
        %v748 = vunpack.c.l.b16 %v328
        %v749 = vunpack.c.h.b16 %v328
        %v750 = vunpack.c.l.b16 %v329
        %v751 = vunpack.c.h.b16 %v329
        %v752 = vunpack.c.l.b16 %v330
        %v753 = vunpack.c.h.b16 %v330
        %v754 = vunpack.c.l.b16 %v331
        %v755 = vunpack.c.h.b16 %v331
        %v756 = vunpack.c.l.b16 %v332
        %v757 = vunpack.c.h.b16 %v332
        %v758 = vunpack.c.l.b16 %v333
        %v759 = vunpack.c.h.b16 %v333
        %v760 = vunpack.c.l.b16 %v334
        %v761 = vunpack.c.h.b16 %v334
        %v762 = vunpack.c.l.b16 %v335
        %v763 = vunpack.c.h.b16 %v335
        %v764 = vunpack.c.l.b16 %v336
        %v765 = vunpack.c.h.b16 %v336
        %v766 = vunpack.c.l.b16 %v337
        %v767 = vunpack.c.h.b16 %v337
        %v768 = vunpack.c.l.b16 %v338
        %v769 = vunpack.c.h.b16 %v338
        %v770 = vunpack.c.l.b16 %v339
        %v771 = vunpack.c.h.b16 %v339
        %v772 = vunpack.c.l.b16 %v340
        %v773 = vunpack.c.h.b16 %v340
        %v774 = vunpack.c.l.b16 %v341
        %v775 = vunpack.c.h.b16 %v341
        %v776 = vunpack.c.l.b16 %v342
        %v777 = vunpack.c.h.b16 %v342
        %v778 = vunpack.c.l.b16 %v343
        %v779 = vunpack.c.h.b16 %v343
        %v780 = vunpack.c.l.b16 %v344
        %v781 = vunpack.c.h.b16 %v344
        %v782 = vunpack.c.l.b16 %v345
        %v783 = vunpack.c.h.b16 %v345
        %v784 = vunpack.c.l.b16 %v346
        %v785 = vunpack.c.h.b16 %v346
        %v786 = vunpack.c.l.b16 %v347
        %v787 = vunpack.c.h.b16 %v347
        %v788 = vunpack.c.l.b16 %v348
        %v789 = vunpack.c.h.b16 %v348
        %v790 = vunpack.c.l.b16 %v349
        %v791 = vunpack.c.h.b16 %v349
        %v792 = vunpack.c.l.b16 %v350
        %v793 = vunpack.c.h.b16 %v350
        %v794 = vunpack.c.l.b16 %v351
        %v795 = vunpack.c.h.b16 %v351
        %v796 = vunpack.c.l.b16 %v352
        %v797 = vunpack.c.h.b16 %v352
        %v798 = vunpack.c.l.b16 %v353
        %v799 = vunpack.c.h.b16 %v353
        %v800 = vunpack.c.l.b16 %v354
        %v801 = vunpack.c.h.b16 %v354
        %v802 = vunpack.c.l.b16 %v355
        %v803 = vunpack.c.h.b16 %v355
        %v804 = vunpack.c.l.b16 %v356
        %v805 = vunpack.c.h.b16 %v356
        %v806 = vunpack.c.l.b16 %v357
        %v807 = vunpack.c.h.b16 %v357
        %v808 = vunpack.c.l.b16 %v358
        %v809 = vunpack.c.h.b16 %v358
        %v810 = vunpack.c.l.b16 %v359
        %v811 = vunpack.c.h.b16 %v359
        %v812 = vunpack.c.l.b16 %v360
        %v813 = vunpack.c.h.b16 %v360
        %v814 = vunpack.c.l.b16 %v361
        %v815 = vunpack.c.h.b16 %v361
        %v816 = vunpack.c.l.b16 %v362
        %v817 = vunpack.c.h.b16 %v362
        %v818 = vunpack.c.l.b16 %v363
        %v819 = vunpack.c.h.b16 %v363
        %v820 = vunpack.c.l.b16 %v364
        %v821 = vunpack.c.h.b16 %v364
        %v822 = vunpack.c.l.b16 %v365
        %v823 = vunpack.c.h.b16 %v365
        %v824 = vunpack.c.l.b16 %v366
        %v825 = vunpack.c.h.b16 %v366
        %v826 = vunpack.c.l.b16 %v367
        %v827 = vunpack.c.h.b16 %v367
        %v828 = vunpack.c.l.b16 %v368
        %v829 = vunpack.c.h.b16 %v368
        %v830 = vunpack.c.l.b16 %v369
        %v831 = vunpack.c.h.b16 %v369
        %v832 = vunpack.c.l.b16 %v370
        %v833 = vunpack.c.h.b16 %v370
        %v834 = vunpack.c.l.b16 %v371
        %v835 = vunpack.c.h.b16 %v371
        %v836 = vunpack.c.l.b16 %v372
        %v837 = vunpack.c.h.b16 %v372
        %v838 = vunpack.c.l.b16 %v373
        %v839 = vunpack.c.h.b16 %v373
        %v840 = vunpack.c.l.b16 %v374
        %v841 = vunpack.c.h.b16 %v374
        %v842 = vunpack.c.l.b16 %v375
        %v843 = vunpack.c.h.b16 %v375
        %v844 = vunpack.c.l.b16 %v376
        %v845 = vunpack.c.h.b16 %v376
        %v846 = vunpack.c.l.b16 %v377
        %v847 = vunpack.c.h.b16 %v377
        %v848 = vunpack.c.l.b16 %v378
        %v849 = vunpack.c.h.b16 %v378
        %v850 = vunpack.c.l.b16 %v379
        %v851 = vunpack.c.h.b16 %v379
        %v852 = vunpack.c.l.b16 %v380
        %v853 = vunpack.c.h.b16 %v380
        %v854 = vunpack.c.l.b16 %v381
        %v855 = vunpack.c.h.b16 %v381
        %v856 = vunpack.c.l.b16 %v382
        %v857 = vunpack.c.h.b16 %v382
        %v858 = vunpack.c.l.b16 %v383
        %v859 = vunpack.c.h.b16 %v383
        %v860 = vunpack.c.l.b16 %v384
        %v861 = vunpack.c.h.b16 %v384
        %v862 = vunpack.c.l.b16 %v385
        %v863 = vunpack.c.h.b16 %v385
        %v864 = vunpack.c.l.b16 %v386
        %v865 = vunpack.c.h.b16 %v386
        %v866 = vunpack.c.l.b16 %v387
        %v867 = vunpack.c.h.b16 %v387
        %v868 = vunpack.c.l.b16 %v388
        %v869 = vunpack.c.h.b16 %v388
        %v870 = vunpack.c.l.b16 %v389
        %v871 = vunpack.c.h.b16 %v389
        %v872 = vunpack.c.l.b16 %v390
        %v873 = vunpack.c.h.b16 %v390
        %v874 = vunpack.c.l.b16 %v391
        %v875 = vunpack.c.h.b16 %v391
        %v876 = vunpack.c.l.b16 %v392
        %v877 = vunpack.c.h.b16 %v392
        %v878 = vunpack.c.l.b16 %v393
        %v879 = vunpack.c.h.b16 %v393
        %v880 = vunpack.c.l.b16 %v394
        %v881 = vunpack.c.h.b16 %v394
        %v882 = vunpack.c.l.b16 %v395
        %v883 = vunpack.c.h.b16 %v395
        %v884 = vunpack.c.l.b16 %v396
        %v885 = vunpack.c.h.b16 %v396
        %v886 = vunpack.c.l.b16 %v397
        %v887 = vunpack.c.h.b16 %v397
        %v888 = vunpack.c.l.b16 %v398
        %v889 = vunpack.c.h.b16 %v398
        %v890 = vunpack.c.l.b16 %v399
        %v891 = vunpack.c.h.b16 %v399
        %v892 = vunpack.c.l.b16 %v400
        %v893 = vunpack.c.h.b16 %v400
        %v894 = vunpack.c.l.b16 %v401
        %v895 = vunpack.c.h.b16 %v401
        %v896 = vunpack.c.l.b16 %v402
        %v897 = vunpack.c.h.b16 %v402
        %v898 = vunpack.c.l.b16 %v403
        %v899 = vunpack.c.h.b16 %v403
        %v900 = vunpack.c.l.b16 %v404
        %v901 = vunpack.c.h.b16 %v404
        %v902 = vunpack.c.l.b16 %v405
        %v903 = vunpack.c.h.b16 %v405
        %v904 = vunpack.c.l.b16 %v406
        %v905 = vunpack.c.h.b16 %v406
        %v906 = vunpack.c.l.b16 %v407
        %v907 = vunpack.c.h.b16 %v407
        %v908 = vunpack.c.l.b16 %v408
        %v909 = vunpack.c.h.b16 %v408
        %v910 = vunpack.c.l.b16 %v409
        %v911 = vunpack.c.h.b16 %v409
        %v912 = vunpack.c.l.b16 %v410
        %v913 = vunpack.c.h.b16 %v410
        %v914 = vunpack.c.l.b16 %v411
        %v915 = vunpack.c.h.b16 %v411
        %v916 = vunpack.c.l.b16 %v412
        %v917 = vunpack.c.h.b16 %v412
        %v918 = vunpack.c.l.b16 %v413
        %v919 = vunpack.c.h.b16 %v413
        %v920 = vunpack.c.l.b16 %v414
        %v921 = vunpack.c.h.b16 %v414
        %v922 = vunpack.c.l.b16 %v415
        %v923 = vunpack.c.h.b16 %v415
        %v924 = vunpack.c.l.b16 %v416
        %v925 = vunpack.c.h.b16 %v416
        %v926 = vunpack.c.l.b16 %v417
        %v927 = vunpack.c.h.b16 %v417
        %v928 = vunpack.c.l.b16 %v418
        %v929 = vunpack.c.h.b16 %v418
        %v930 = vunpack.c.l.b16 %v419
        %v931 = vunpack.c.h.b16 %v419
        %v932 = vunpack.c.l.b16 %v420
        %v933 = vunpack.c.h.b16 %v420
        %v934 = vunpack.c.l.b16 %v421
        %v935 = vunpack.c.h.b16 %v421
        %v936 = vunpack.c.l.b16 %v422
        %v937 = vunpack.c.h.b16 %v422
        %v938 = vunpack.c.l.b16 %v423
        %v939 = vunpack.c.h.b16 %v423
        %v940 = vunpack.c.l.b16 %v424
        %v941 = vunpack.c.h.b16 %v424
        %v942 = vunpack.c.l.b16 %v425
        %v943 = vunpack.c.h.b16 %v425
        %v944 = vunpack.c.l.b16 %v426
        %v945 = vunpack.c.h.b16 %v426
        %v946 = vunpack.c.l.b16 %v427
        %v947 = vunpack.c.h.b16 %v427
        %v948 = vunpack.c.l.b16 %v428
        %v949 = vunpack.c.h.b16 %v428
        %v950 = vunpack.c.l.b16 %v429
        %v951 = vunpack.c.h.b16 %v429
        %v952 = vunpack.c.l.b16 %v430
        %v953 = vunpack.c.h.b16 %v430
        %v954 = vunpack.c.l.b16 %v431
        %v955 = vunpack.c.h.b16 %v431
        %v956 = vunpack.c.l.b16 %v432
        %v957 = vunpack.c.h.b16 %v432
        %v958 = vunpack.c.l.b16 %v433
        %v959 = vunpack.c.h.b16 %v433
        %v960 = vunpack.c.l.b16 %v434
        %v961 = vunpack.c.h.b16 %v434
        %v962 = vunpack.c.l.b16 %v435
        %v963 = vunpack.c.h.b16 %v435
        %v964 = vunpack.c.l.b16 %v436
        %v965 = vunpack.c.h.b16 %v436
        %v966 = vunpack.c.l.b16 %v437
        %v967 = vunpack.c.h.b16 %v437
        %v968 = vunpack.c.l.b16 %v438
        %v969 = vunpack.c.h.b16 %v438
        %v970 = vunpack.c.l.b16 %v439
        %v971 = vunpack.c.h.b16 %v439
        %v972 = vunpack.c.l.b16 %v440
        %v973 = vunpack.c.h.b16 %v440
        %v974 = vunpack.c.l.b16 %v441
        %v975 = vunpack.c.h.b16 %v441
        %v976 = vunpack.c.l.b16 %v442
        %v977 = vunpack.c.h.b16 %v442
        %v978 = vunpack.c.l.b16 %v443
        %v979 = vunpack.c.h.b16 %v443
        %v980 = vunpack.c.l.b16 %v444
        %v981 = vunpack.c.h.b16 %v444
        %v982 = vunpack.c.l.b16 %v445
        %v983 = vunpack.c.h.b16 %v445
        %v984 = vunpack.c.l.b16 %v446
        %v985 = vunpack.c.h.b16 %v446
        %v986 = vunpack.c.l.b16 %v447
        %v987 = vunpack.c.h.b16 %v447
        %v988 = vunpack.c.l.b16 %v448
        %v989 = vunpack.c.h.b16 %v448
        %v990 = vunpack.c.l.b16 %v449
        %v991 = vunpack.c.h.b16 %v449
        %v992 = vunpack.c.l.b16 %v450
        %v993 = vunpack.c.h.b16 %v450
        %v994 = vunpack.c.l.b16 %v451
        %v995 = vunpack.c.h.b16 %v451
        %v996 = vunpack.c.l.b16 %v452
        %v997 = vunpack.c.h.b16 %v452
        %v998 = vunpack.c.l.b16 %v453
        %v999 = vunpack.c.h.b16 %v453
        %v1000 = vunpack.c.l.b16 %v454
        %v1001 = vunpack.c.h.b16 %v454
        %v1002 = vunpack.c.l.b16 %v455
        %v1003 = vunpack.c.h.b16 %v455
        %v1004 = vunpack.c.l.b16 %v456
        %v1005 = vunpack.c.h.b16 %v456
        %v1006 = vunpack.c.l.b16 %v457
        %v1007 = vunpack.c.h.b16 %v457
        %v1008 = vunpack.c.l.b16 %v458
        %v1009 = vunpack.c.h.b16 %v458
        %v1010 = vunpack.c.l.b16 %v459
        %v1011 = vunpack.c.h.b16 %v459
        %v1012 = vunpack.c.l.b16 %v460
        %v1013 = vunpack.c.h.b16 %v460
        %v1014 = vunpack.c.l.b16 %v461
        %v1015 = vunpack.c.h.b16 %v461
        %v1016 = vunpack.c.l.b16 %v462
        %v1017 = vunpack.c.h.b16 %v462
        %v1018 = vunpack.c.l.b16 %v463
        %v1019 = vunpack.c.h.b16 %v463
        %v1020 = vunpack.c.l.b16 %v464
        %v1021 = vunpack.c.h.b16 %v464
        %v1022 = vunpack.c.l.b16 %v465
        %v1023 = vunpack.c.h.b16 %v465
        %v1024 = vunpack.c.l.b16 %v466
        %v1025 = vunpack.c.h.b16 %v466
        %v1026 = vunpack.c.l.b16 %v467
        %v1027 = vunpack.c.h.b16 %v467
        %v1028 = vunpack.c.l.b16 %v468
        %v1029 = vunpack.c.h.b16 %v468
        %v1030 = vunpack.c.l.b16 %v469
        %v1031 = vunpack.c.h.b16 %v469
        %v1032 = vunpack.c.l.b16 %v470
        %v1033 = vunpack.c.h.b16 %v470
        %v1034 = vunpack.c.l.b16 %v471
        %v1035 = vunpack.c.h.b16 %v471
        %v1036 = vunpack.c.l.b16 %v472
        %v1037 = vunpack.c.h.b16 %v472
        %v1038 = vunpack.c.l.b16 %v473
        %v1039 = vunpack.c.h.b16 %v473
        %v1040 = vunpack.c.l.b16 %v474
        %v1041 = vunpack.c.h.b16 %v474
        %v1042 = vunpack.c.l.b16 %v475
        %v1043 = vunpack.c.h.b16 %v475
        %v1044 = vunpack.c.l.b16 %v476
        %v1045 = vunpack.c.h.b16 %v476
        %v1046 = vunpack.c.l.b16 %v477
        %v1047 = vunpack.c.h.b16 %v477
        %v1048 = vunpack.c.l.b16 %v478
        %v1049 = vunpack.c.h.b16 %v478
        %v1050 = vunpack.c.l.b16 %v479
        %v1051 = vunpack.c.h.b16 %v479
        %v1052 = vunpack.c.l.b16 %v480
        %v1053 = vunpack.c.h.b16 %v480
        %v1054 = vunpack.c.l.b16 %v481
        %v1055 = vunpack.c.h.b16 %v481
        %v1056 = vunpack.c.l.b16 %v482
        %v1057 = vunpack.c.h.b16 %v482
        %v1058 = vunpack.c.l.b16 %v483
        %v1059 = vunpack.c.h.b16 %v483
        %v1060 = vunpack.c.l.b16 %v484
        %v1061 = vunpack.c.h.b16 %v484
        %v1062 = vunpack.c.l.b16 %v485
        %v1063 = vunpack.c.h.b16 %v485
        %v1064 = vunpack.c.l.b16 %v486
        %v1065 = vunpack.c.h.b16 %v486
        %v1066 = vunpack.c.l.b16 %v487
        %v1067 = vunpack.c.h.b16 %v487
        %v1068 = vunpack.c.l.b16 %v488
        %v1069 = vunpack.c.h.b16 %v488
        %v1070 = vunpack.c.l.b16 %v489
        %v1071 = vunpack.c.h.b16 %v489
        %v1072 = vunpack.c.l.b16 %v490
        %v1073 = vunpack.c.h.b16 %v490
        %v1074 = vunpack.c.l.b16 %v491
        %v1075 = vunpack.c.h.b16 %v491
        %v1076 = vunpack.c.l.b16 %v492
        %v1077 = vunpack.c.h.b16 %v492
        %v1078 = vunpack.c.l.b16 %v493
        %v1079 = vunpack.c.h.b16 %v493
        %v1080 = vunpack.c.l.b16 %v494
        %v1081 = vunpack.c.h.b16 %v494
        %v1082 = vunpack.c.l.b16 %v495
        %v1083 = vunpack.c.h.b16 %v495
        %v1084 = vunpack.c.l.b16 %v496
        %v1085 = vunpack.c.h.b16 %v496
        %v1086 = vunpack.c.l.b16 %v497
        %v1087 = vunpack.c.h.b16 %v497
        %v1088 = vunpack.c.l.b16 %v498
        %v1089 = vunpack.c.h.b16 %v498
        %v1090 = vunpack.c.l.b16 %v499
        %v1091 = vunpack.c.h.b16 %v499
        %v1092 = vunpack.c.l.b16 %v500
        %v1093 = vunpack.c.h.b16 %v500
        %v1094 = vunpack.c.l.b16 %v501
        %v1095 = vunpack.c.h.b16 %v501
        %v1096 = vunpack.c.l.b16 %v502
        %v1097 = vunpack.c.h.b16 %v502
        %v1098 = vunpack.c.l.b16 %v503
        %v1099 = vunpack.c.h.b16 %v503
        %v1100 = vunpack.c.l.b16 %v504
        %v1101 = vunpack.c.h.b16 %v504
        %v1102 = vpack.c.b16 %v714, %v710
        %v1103 = vpack.c.b16 %v715, %v711
        %v1104 = vpack.c.b16 %v716, %v712
        %v1105 = vpack.c.b16 %v717, %v713
        %v1106 = vpack.c.b16 %v722, %v718
        %v1107 = vpack.c.b16 %v723, %v719
        %v1108 = vpack.c.b16 %v724, %v720
        %v1109 = vpack.c.b16 %v725, %v721
        %v1110 = vpack.c.b16 %v730, %v726
        %v1111 = vpack.c.b16 %v731, %v727
        %v1112 = vpack.c.b16 %v732, %v728
        %v1113 = vpack.c.b16 %v733, %v729
        %v1114 = vpack.c.b16 %v738, %v734
        %v1115 = vpack.c.b16 %v739, %v735
        %v1116 = vpack.c.b16 %v740, %v736
        %v1117 = vpack.c.b16 %v741, %v737
        %v1118 = vpack.c.b16 %v746, %v742
        %v1119 = vpack.c.b16 %v747, %v743
        %v1120 = vpack.c.b16 %v748, %v744
        %v1121 = vpack.c.b16 %v749, %v745
        %v1122 = vpack.c.b16 %v754, %v750
        %v1123 = vpack.c.b16 %v755, %v751
        %v1124 = vpack.c.b16 %v756, %v752
        %v1125 = vpack.c.b16 %v757, %v753
        %v1126 = vpack.c.b16 %v762, %v758
        %v1127 = vpack.c.b16 %v763, %v759
        %v1128 = vpack.c.b16 %v764, %v760
        %v1129 = vpack.c.b16 %v765, %v761
        %v1130 = vpack.c.b16 %v770, %v766
        %v1131 = vpack.c.b16 %v771, %v767
        %v1132 = vpack.c.b16 %v772, %v768
        %v1133 = vpack.c.b16 %v773, %v769
        %v1134 = vpack.c.b16 %v778, %v774
        %v1135 = vpack.c.b16 %v779, %v775
        %v1136 = vpack.c.b16 %v780, %v776
        %v1137 = vpack.c.b16 %v781, %v777
        %v1138 = vpack.c.b16 %v786, %v782
        %v1139 = vpack.c.b16 %v787, %v783
        %v1140 = vpack.c.b16 %v788, %v784
        %v1141 = vpack.c.b16 %v789, %v785
        %v1142 = vpack.c.b16 %v794, %v790
        %v1143 = vpack.c.b16 %v795, %v791
        %v1144 = vpack.c.b16 %v796, %v792
        %v1145 = vpack.c.b16 %v797, %v793
        %v1146 = vpack.c.b16 %v802, %v798
        %v1147 = vpack.c.b16 %v803, %v799
        %v1148 = vpack.c.b16 %v804, %v800
        %v1149 = vpack.c.b16 %v805, %v801
        %v1150 = vpack.c.b16 %v810, %v806
        %v1151 = vpack.c.b16 %v811, %v807
        %v1152 = vpack.c.b16 %v812, %v808
        %v1153 = vpack.c.b16 %v813, %v809
        %v1154 = vpack.c.b16 %v818, %v814
        %v1155 = vpack.c.b16 %v819, %v815
        %v1156 = vpack.c.b16 %v820, %v816
        %v1157 = vpack.c.b16 %v821, %v817
        %v1158 = vpack.c.b16 %v826, %v822
        %v1159 = vpack.c.b16 %v827, %v823
        %v1160 = vpack.c.b16 %v828, %v824
        %v1161 = vpack.c.b16 %v829, %v825
        %v1162 = vpack.c.b16 %v834, %v830
        %v1163 = vpack.c.b16 %v835, %v831
        %v1164 = vpack.c.b16 %v836, %v832
        %v1165 = vpack.c.b16 %v837, %v833
        %v1166 = vpack.c.b16 %v842, %v838
        %v1167 = vpack.c.b16 %v843, %v839
        %v1168 = vpack.c.b16 %v844, %v840
        %v1169 = vpack.c.b16 %v845, %v841
        %v1170 = vpack.c.b16 %v850, %v846
        %v1171 = vpack.c.b16 %v851, %v847
        %v1172 = vpack.c.b16 %v852, %v848
        %v1173 = vpack.c.b16 %v853, %v849
        %v1174 = vpack.c.b16 %v858, %v854
        %v1175 = vpack.c.b16 %v859, %v855
        %v1176 = vpack.c.b16 %v860, %v856
        %v1177 = vpack.c.b16 %v861, %v857
        %v1178 = vpack.c.b16 %v866, %v862
        %v1179 = vpack.c.b16 %v867, %v863
        %v1180 = vpack.c.b16 %v868, %v864
        %v1181 = vpack.c.b16 %v869, %v865
        %v1182 = vpack.c.b16 %v874, %v870
        %v1183 = vpack.c.b16 %v875, %v871
        %v1184 = vpack.c.b16 %v876, %v872
        %v1185 = vpack.c.b16 %v877, %v873
        %v1186 = vpack.c.b16 %v882, %v878
        %v1187 = vpack.c.b16 %v883, %v879
        %v1188 = vpack.c.b16 %v884, %v880
        %v1189 = vpack.c.b16 %v885, %v881
        %v1190 = vpack.c.b16 %v890, %v886
        %v1191 = vpack.c.b16 %v891, %v887
        %v1192 = vpack.c.b16 %v892, %v888
        %v1193 = vpack.c.b16 %v893, %v889
        %v1194 = vpack.c.b16 %v898, %v894
        %v1195 = vpack.c.b16 %v899, %v895
        %v1196 = vpack.c.b16 %v900, %v896
        %v1197 = vpack.c.b16 %v901, %v897
        %v1198 = vpack.c.b16 %v906, %v902
        %v1199 = vpack.c.b16 %v907, %v903
        %v1200 = vpack.c.b16 %v908, %v904
        %v1201 = vpack.c.b16 %v909, %v905
        %v1202 = vpack.c.b16 %v914, %v910
        %v1203 = vpack.c.b16 %v915, %v911
        %v1204 = vpack.c.b16 %v916, %v912
        %v1205 = vpack.c.b16 %v917, %v913
        %v1206 = vpack.c.b16 %v922, %v918
        %v1207 = vpack.c.b16 %v923, %v919
        %v1208 = vpack.c.b16 %v924, %v920
        %v1209 = vpack.c.b16 %v925, %v921
        %v1210 = vpack.c.b16 %v930, %v926
        %v1211 = vpack.c.b16 %v931, %v927
        %v1212 = vpack.c.b16 %v932, %v928
        %v1213 = vpack.c.b16 %v933, %v929
        %v1214 = vpack.c.b16 %v938, %v934
        %v1215 = vpack.c.b16 %v939, %v935
        %v1216 = vpack.c.b16 %v940, %v936
        %v1217 = vpack.c.b16 %v941, %v937
        %v1218 = vpack.c.b16 %v946, %v942
        %v1219 = vpack.c.b16 %v947, %v943
        %v1220 = vpack.c.b16 %v948, %v944
        %v1221 = vpack.c.b16 %v949, %v945
        %v1222 = vpack.c.b16 %v954, %v950
        %v1223 = vpack.c.b16 %v955, %v951
        %v1224 = vpack.c.b16 %v956, %v952
        %v1225 = vpack.c.b16 %v957, %v953
        %v1226 = vpack.c.b16 %v962, %v958
        %v1227 = vpack.c.b16 %v963, %v959
        %v1228 = vpack.c.b16 %v964, %v960
        %v1229 = vpack.c.b16 %v965, %v961
        %v1230 = vpack.c.b16 %v970, %v966
        %v1231 = vpack.c.b16 %v971, %v967
        %v1232 = vpack.c.b16 %v972, %v968
        %v1233 = vpack.c.b16 %v973, %v969
        %v1234 = vpack.c.b16 %v978, %v974
        %v1235 = vpack.c.b16 %v979, %v975
        %v1236 = vpack.c.b16 %v980, %v976
        %v1237 = vpack.c.b16 %v981, %v977
        %v1238 = vpack.c.b16 %v986, %v982
        %v1239 = vpack.c.b16 %v987, %v983
        %v1240 = vpack.c.b16 %v988, %v984
        %v1241 = vpack.c.b16 %v989, %v985
        %v1242 = vpack.c.b16 %v994, %v990
        %v1243 = vpack.c.b16 %v995, %v991
        %v1244 = vpack.c.b16 %v996, %v992
        %v1245 = vpack.c.b16 %v997, %v993
        %v1246 = vpack.c.b16 %v1002, %v998
        %v1247 = vpack.c.b16 %v1003, %v999
        %v1248 = vpack.c.b16 %v1004, %v1000
        %v1249 = vpack.c.b16 %v1005, %v1001
        %v1250 = vpack.c.b16 %v1010, %v1006
        %v1251 = vpack.c.b16 %v1011, %v1007
        %v1252 = vpack.c.b16 %v1012, %v1008
        %v1253 = vpack.c.b16 %v1013, %v1009
        %v1254 = vpack.c.b16 %v1018, %v1014
        %v1255 = vpack.c.b16 %v1019, %v1015
        %v1256 = vpack.c.b16 %v1020, %v1016
        %v1257 = vpack.c.b16 %v1021, %v1017
        %v1258 = vpack.c.b16 %v1026, %v1022
        %v1259 = vpack.c.b16 %v1027, %v1023
        %v1260 = vpack.c.b16 %v1028, %v1024
        %v1261 = vpack.c.b16 %v1029, %v1025
        %v1262 = vpack.c.b16 %v1034, %v1030
        %v1263 = vpack.c.b16 %v1035, %v1031
        %v1264 = vpack.c.b16 %v1036, %v1032
        %v1265 = vpack.c.b16 %v1037, %v1033
        %v1266 = vpack.c.b16 %v1042, %v1038
        %v1267 = vpack.c.b16 %v1043, %v1039
        %v1268 = vpack.c.b16 %v1044, %v1040
        %v1269 = vpack.c.b16 %v1045, %v1041
        %v1270 = vpack.c.b16 %v1050, %v1046
        %v1271 = vpack.c.b16 %v1051, %v1047
        %v1272 = vpack.c.b16 %v1052, %v1048
        %v1273 = vpack.c.b16 %v1053, %v1049
        %v1274 = vpack.c.b16 %v1058, %v1054
        %v1275 = vpack.c.b16 %v1059, %v1055
        %v1276 = vpack.c.b16 %v1060, %v1056
        %v1277 = vpack.c.b16 %v1061, %v1057
        %v1278 = vpack.c.b16 %v1066, %v1062
        %v1279 = vpack.c.b16 %v1067, %v1063
        %v1280 = vpack.c.b16 %v1068, %v1064
        %v1281 = vpack.c.b16 %v1069, %v1065
        %v1282 = vpack.c.b16 %v1074, %v1070
        %v1283 = vpack.c.b16 %v1075, %v1071
        %v1284 = vpack.c.b16 %v1076, %v1072
        %v1285 = vpack.c.b16 %v1077, %v1073
        %v1286 = vpack.c.b16 %v1082, %v1078
        %v1287 = vpack.c.b16 %v1083, %v1079
        %v1288 = vpack.c.b16 %v1084, %v1080
        %v1289 = vpack.c.b16 %v1085, %v1081
        %v1290 = vpack.c.b16 %v1090, %v1086
        %v1291 = vpack.c.b16 %v1091, %v1087
        %v1292 = vpack.c.b16 %v1092, %v1088
        %v1293 = vpack.c.b16 %v1093, %v1089
        %v1294 = vpack.c.b16 %v1098, %v1094
        %v1295 = vpack.c.b16 %v1099, %v1095
        %v1296 = vpack.c.b16 %v1100, %v1096
        %v1297 = vpack.c.b16 %v1101, %v1097
        %vm1494 = vcmask 130048
        %v1496 = vsel %vm1494, %v308, 0
        %1498 = vmatpush.bf16.msra.mxu0 %v1130
        %1499 = vmatpush.bf16.msra.mxu0 %v1126
        %1500 = vmatpush.bf16.msra.mxu0 %v1122
        %1501 = vmatpush.bf16.msra.mxu0 %v1118
        %1502 = vmatpush.bf16.msra.mxu0 %v1114
        %1503 = vmatpush.bf16.msra.mxu0 %v1110
        %1504 = vmatpush.bf16.msra.mxu0 %v1106
        %1505 = vmatpush.bf16.msra.mxu0 %v1102
        %1506 = vmatmul.bf16.gmra.mxu0 %v302
        %v1507 = vpop.f32.mrf.mxu0
        %v1508 = vadd.f32 %v506, %v1507
        %v1509 = vpop.f32.mrf.mxu0
        %1510 = vdwg.mxu0
        %1511 = vmatpush.bf16.msra.mxu0 %v1162
        %1512 = vmatpush.bf16.msra.mxu0 %v1158
        %1513 = vmatpush.bf16.msra.mxu0 %v1154
        %1514 = vmatpush.bf16.msra.mxu0 %v1150
        %1515 = vmatpush.bf16.msra.mxu0 %v1146
        %1516 = vmatpush.bf16.msra.mxu0 %v1142
        %1517 = vmatpush.bf16.msra.mxu0 %v1138
        %1518 = vmatpush.bf16.msra.mxu0 %v1134
        %1519 = vmatmul.bf16.gmra.mxu0 %v303
        %v1520 = vpop.f32.mrf.mxu0
        %v1521 = vadd.f32 %v1508, %v1520
        %v1522 = vpop.f32.mrf.mxu0
        %1523 = vdwg.mxu0
        %1524 = vmatpush.bf16.msra.mxu0 %v1194
        %1525 = vmatpush.bf16.msra.mxu0 %v1190
        %1526 = vmatpush.bf16.msra.mxu0 %v1186
        %1527 = vmatpush.bf16.msra.mxu0 %v1182
        %1528 = vmatpush.bf16.msra.mxu0 %v1178
        %1529 = vmatpush.bf16.msra.mxu0 %v1174
        %1530 = vmatpush.bf16.msra.mxu0 %v1170
        %1531 = vmatpush.bf16.msra.mxu0 %v1166
        %1532 = vmatmul.bf16.gmra.mxu0 %v304
        %v1533 = vpop.f32.mrf.mxu0
        %v1534 = vadd.f32 %v1521, %v1533
        %v1535 = vpop.f32.mrf.mxu0
        %1536 = vdwg.mxu0
        %1537 = vmatpush.bf16.msra.mxu0 %v1226
        %1538 = vmatpush.bf16.msra.mxu0 %v1222
        %1539 = vmatpush.bf16.msra.mxu0 %v1218
        %1540 = vmatpush.bf16.msra.mxu0 %v1214
        %1541 = vmatpush.bf16.msra.mxu0 %v1210
        %1542 = vmatpush.bf16.msra.mxu0 %v1206
        %1543 = vmatpush.bf16.msra.mxu0 %v1202
        %1544 = vmatpush.bf16.msra.mxu0 %v1198
        %1545 = vmatmul.bf16.gmra.mxu0 %v305
        %v1546 = vpop.f32.mrf.mxu0
        %v1547 = vadd.f32 %v1534, %v1546
        %v1548 = vpop.f32.mrf.mxu0
        %1549 = vdwg.mxu0
        %1550 = vmatpush.bf16.msra.mxu0 %v1258
        %1551 = vmatpush.bf16.msra.mxu0 %v1254
        %1552 = vmatpush.bf16.msra.mxu0 %v1250
        %1553 = vmatpush.bf16.msra.mxu0 %v1246
        %1554 = vmatpush.bf16.msra.mxu0 %v1242
        %1555 = vmatpush.bf16.msra.mxu0 %v1238
        %1556 = vmatpush.bf16.msra.mxu0 %v1234
        %1557 = vmatpush.bf16.msra.mxu0 %v1230
        %1558 = vmatmul.bf16.gmra.mxu0 %v306
        %v1559 = vpop.f32.mrf.mxu0
        %v1560 = vadd.f32 %v1547, %v1559
        %v1561 = vpop.f32.mrf.mxu0
        %1562 = vdwg.mxu0
        %1563 = vmatpush.bf16.msra.mxu0 %v1290
        %1564 = vmatpush.bf16.msra.mxu0 %v1286
        %1565 = vmatpush.bf16.msra.mxu0 %v1282
        %1566 = vmatpush.bf16.msra.mxu0 %v1278
        %1567 = vmatpush.bf16.msra.mxu0 %v1274
        %1568 = vmatpush.bf16.msra.mxu0 %v1270
        %1569 = vmatpush.bf16.msra.mxu0 %v1266
        %1570 = vmatpush.bf16.msra.mxu0 %v1262
        %1571 = vmatmul.bf16.gmra.mxu0 %v307
        %v1572 = vpop.f32.mrf.mxu0
        %v1573 = vadd.f32 %v1560, %v1572
        %v1574 = vpop.f32.mrf.mxu0
        %1575 = vdwg.mxu0
        %1576 = vmatpush.bf16.msra.mxu0 0
        %1577 = vmatpush.bf16.msra.mxu0 0
        %1578 = vmatpush.bf16.msra.mxu0 0
        %1579 = vmatpush.bf16.msra.mxu0 0
        %1580 = vmatpush.bf16.msra.mxu0 0
        %1581 = vmatpush.bf16.msra.mxu0 0
        %1582 = vmatpush.bf16.msra.mxu0 0
        %1583 = vmatpush.bf16.msra.mxu0 %v1294
        %1584 = vmatmul.bf16.gmra.mxu0 %v1496
        %v1585 = vpop.f32.mrf.mxu0
        %v1586 = vadd.f32 %v1573, %v1585
        %v1587 = vpop.f32.mrf.mxu0
        %1588 = vdwg.mxu0
        %1589 = vmatpush.bf16.msra.mxu0 %v1131
        %1590 = vmatpush.bf16.msra.mxu0 %v1127
        %1591 = vmatpush.bf16.msra.mxu0 %v1123
        %1592 = vmatpush.bf16.msra.mxu0 %v1119
        %1593 = vmatpush.bf16.msra.mxu0 %v1115
        %1594 = vmatpush.bf16.msra.mxu0 %v1111
        %1595 = vmatpush.bf16.msra.mxu0 %v1107
        %1596 = vmatpush.bf16.msra.mxu0 %v1103
        %1597 = vmatmul.bf16.gmra.mxu0 %v302
        %v1598 = vpop.f32.mrf.mxu0
        %v1599 = vadd.f32 %v507, %v1598
        %v1600 = vpop.f32.mrf.mxu0
        %1601 = vdwg.mxu0
        %1602 = vmatpush.bf16.msra.mxu0 %v1163
        %1603 = vmatpush.bf16.msra.mxu0 %v1159
        %1604 = vmatpush.bf16.msra.mxu0 %v1155
        %1605 = vmatpush.bf16.msra.mxu0 %v1151
        %1606 = vmatpush.bf16.msra.mxu0 %v1147
        %1607 = vmatpush.bf16.msra.mxu0 %v1143
        %1608 = vmatpush.bf16.msra.mxu0 %v1139
        %1609 = vmatpush.bf16.msra.mxu0 %v1135
        %1610 = vmatmul.bf16.gmra.mxu0 %v303
        %v1611 = vpop.f32.mrf.mxu0
        %v1612 = vadd.f32 %v1599, %v1611
        %v1613 = vpop.f32.mrf.mxu0
        %1614 = vdwg.mxu0
        %1615 = vmatpush.bf16.msra.mxu0 %v1195
        %1616 = vmatpush.bf16.msra.mxu0 %v1191
        %1617 = vmatpush.bf16.msra.mxu0 %v1187
        %1618 = vmatpush.bf16.msra.mxu0 %v1183
        %1619 = vmatpush.bf16.msra.mxu0 %v1179
        %1620 = vmatpush.bf16.msra.mxu0 %v1175
        %1621 = vmatpush.bf16.msra.mxu0 %v1171
        %1622 = vmatpush.bf16.msra.mxu0 %v1167
        %1623 = vmatmul.bf16.gmra.mxu0 %v304
        %v1624 = vpop.f32.mrf.mxu0
        %v1625 = vadd.f32 %v1612, %v1624
        %v1626 = vpop.f32.mrf.mxu0
        %1627 = vdwg.mxu0
        %1628 = vmatpush.bf16.msra.mxu0 %v1227
        %1629 = vmatpush.bf16.msra.mxu0 %v1223
        %1630 = vmatpush.bf16.msra.mxu0 %v1219
        %1631 = vmatpush.bf16.msra.mxu0 %v1215
        %1632 = vmatpush.bf16.msra.mxu0 %v1211
        %1633 = vmatpush.bf16.msra.mxu0 %v1207
        %1634 = vmatpush.bf16.msra.mxu0 %v1203
        %1635 = vmatpush.bf16.msra.mxu0 %v1199
        %1636 = vmatmul.bf16.gmra.mxu0 %v305
        %v1637 = vpop.f32.mrf.mxu0
        %v1638 = vadd.f32 %v1625, %v1637
        %v1639 = vpop.f32.mrf.mxu0
        %1640 = vdwg.mxu0
        %1641 = vmatpush.bf16.msra.mxu0 %v1259
        %1642 = vmatpush.bf16.msra.mxu0 %v1255
        %1643 = vmatpush.bf16.msra.mxu0 %v1251
        %1644 = vmatpush.bf16.msra.mxu0 %v1247
        %1645 = vmatpush.bf16.msra.mxu0 %v1243
        %1646 = vmatpush.bf16.msra.mxu0 %v1239
        %1647 = vmatpush.bf16.msra.mxu0 %v1235
        %1648 = vmatpush.bf16.msra.mxu0 %v1231
        %1649 = vmatmul.bf16.gmra.mxu0 %v306
        %v1650 = vpop.f32.mrf.mxu0
        %v1651 = vadd.f32 %v1638, %v1650
        %v1652 = vpop.f32.mrf.mxu0
        %1653 = vdwg.mxu0
        %1654 = vmatpush.bf16.msra.mxu0 %v1291
        %1655 = vmatpush.bf16.msra.mxu0 %v1287
        %1656 = vmatpush.bf16.msra.mxu0 %v1283
        %1657 = vmatpush.bf16.msra.mxu0 %v1279
        %1658 = vmatpush.bf16.msra.mxu0 %v1275
        %1659 = vmatpush.bf16.msra.mxu0 %v1271
        %1660 = vmatpush.bf16.msra.mxu0 %v1267
        %1661 = vmatpush.bf16.msra.mxu0 %v1263
        %1662 = vmatmul.bf16.gmra.mxu0 %v307
        %v1663 = vpop.f32.mrf.mxu0
        %v1664 = vadd.f32 %v1651, %v1663
        %v1665 = vpop.f32.mrf.mxu0
        %1666 = vdwg.mxu0
        %1667 = vmatpush.bf16.msra.mxu0 0
        %1668 = vmatpush.bf16.msra.mxu0 0
        %1669 = vmatpush.bf16.msra.mxu0 0
        %1670 = vmatpush.bf16.msra.mxu0 0
        %1671 = vmatpush.bf16.msra.mxu0 0
        %1672 = vmatpush.bf16.msra.mxu0 0
        %1673 = vmatpush.bf16.msra.mxu0 0
        %1674 = vmatpush.bf16.msra.mxu0 %v1295
        %1675 = vmatmul.bf16.gmra.mxu0 %v1496
        %v1676 = vpop.f32.mrf.mxu0
        %v1677 = vadd.f32 %v1664, %v1676
        %v1678 = vpop.f32.mrf.mxu0
        %1679 = vdwg.mxu0
        %1680 = vmatpush.bf16.msra.mxu0 %v1132
        %1681 = vmatpush.bf16.msra.mxu0 %v1128
        %1682 = vmatpush.bf16.msra.mxu0 %v1124
        %1683 = vmatpush.bf16.msra.mxu0 %v1120
        %1684 = vmatpush.bf16.msra.mxu0 %v1116
        %1685 = vmatpush.bf16.msra.mxu0 %v1112
        %1686 = vmatpush.bf16.msra.mxu0 %v1108
        %1687 = vmatpush.bf16.msra.mxu0 %v1104
        %1688 = vmatmul.bf16.gmra.mxu0 %v302
        %v1689 = vpop.f32.mrf.mxu0
        %v1690 = vadd.f32 %v508, %v1689
        %v1691 = vpop.f32.mrf.mxu0
        %1692 = vdwg.mxu0
        %1693 = vmatpush.bf16.msra.mxu0 %v1164
        %1694 = vmatpush.bf16.msra.mxu0 %v1160
        %1695 = vmatpush.bf16.msra.mxu0 %v1156
        %1696 = vmatpush.bf16.msra.mxu0 %v1152
        %1697 = vmatpush.bf16.msra.mxu0 %v1148
        %1698 = vmatpush.bf16.msra.mxu0 %v1144
        %1699 = vmatpush.bf16.msra.mxu0 %v1140
        %1700 = vmatpush.bf16.msra.mxu0 %v1136
        %1701 = vmatmul.bf16.gmra.mxu0 %v303
        %v1702 = vpop.f32.mrf.mxu0
        %v1703 = vadd.f32 %v1690, %v1702
        %v1704 = vpop.f32.mrf.mxu0
        %1705 = vdwg.mxu0
        %1706 = vmatpush.bf16.msra.mxu0 %v1196
        %1707 = vmatpush.bf16.msra.mxu0 %v1192
        %1708 = vmatpush.bf16.msra.mxu0 %v1188
        %1709 = vmatpush.bf16.msra.mxu0 %v1184
        %1710 = vmatpush.bf16.msra.mxu0 %v1180
        %1711 = vmatpush.bf16.msra.mxu0 %v1176
        %1712 = vmatpush.bf16.msra.mxu0 %v1172
        %1713 = vmatpush.bf16.msra.mxu0 %v1168
        %1714 = vmatmul.bf16.gmra.mxu0 %v304
        %v1715 = vpop.f32.mrf.mxu0
        %v1716 = vadd.f32 %v1703, %v1715
        %v1717 = vpop.f32.mrf.mxu0
        %1718 = vdwg.mxu0
        %1719 = vmatpush.bf16.msra.mxu0 %v1228
        %1720 = vmatpush.bf16.msra.mxu0 %v1224
        %1721 = vmatpush.bf16.msra.mxu0 %v1220
        %1722 = vmatpush.bf16.msra.mxu0 %v1216
        %1723 = vmatpush.bf16.msra.mxu0 %v1212
        %1724 = vmatpush.bf16.msra.mxu0 %v1208
        %1725 = vmatpush.bf16.msra.mxu0 %v1204
        %1726 = vmatpush.bf16.msra.mxu0 %v1200
        %1727 = vmatmul.bf16.gmra.mxu0 %v305
        %v1728 = vpop.f32.mrf.mxu0
        %v1729 = vadd.f32 %v1716, %v1728
        %v1730 = vpop.f32.mrf.mxu0
        %1731 = vdwg.mxu0
        %1732 = vmatpush.bf16.msra.mxu0 %v1260
        %1733 = vmatpush.bf16.msra.mxu0 %v1256
        %1734 = vmatpush.bf16.msra.mxu0 %v1252
        %1735 = vmatpush.bf16.msra.mxu0 %v1248
        %1736 = vmatpush.bf16.msra.mxu0 %v1244
        %1737 = vmatpush.bf16.msra.mxu0 %v1240
        %1738 = vmatpush.bf16.msra.mxu0 %v1236
        %1739 = vmatpush.bf16.msra.mxu0 %v1232
        %1740 = vmatmul.bf16.gmra.mxu0 %v306
        %v1741 = vpop.f32.mrf.mxu0
        %v1742 = vadd.f32 %v1729, %v1741
        %v1743 = vpop.f32.mrf.mxu0
        %1744 = vdwg.mxu0
        %1745 = vmatpush.bf16.msra.mxu0 %v1292
        %1746 = vmatpush.bf16.msra.mxu0 %v1288
        %1747 = vmatpush.bf16.msra.mxu0 %v1284
        %1748 = vmatpush.bf16.msra.mxu0 %v1280
        %1749 = vmatpush.bf16.msra.mxu0 %v1276
        %1750 = vmatpush.bf16.msra.mxu0 %v1272
        %1751 = vmatpush.bf16.msra.mxu0 %v1268
        %1752 = vmatpush.bf16.msra.mxu0 %v1264
        %1753 = vmatmul.bf16.gmra.mxu0 %v307
        %v1754 = vpop.f32.mrf.mxu0
        %v1755 = vadd.f32 %v1742, %v1754
        %v1756 = vpop.f32.mrf.mxu0
        %1757 = vdwg.mxu0
        %1758 = vmatpush.bf16.msra.mxu0 0
        %1759 = vmatpush.bf16.msra.mxu0 0
        %1760 = vmatpush.bf16.msra.mxu0 0
        %1761 = vmatpush.bf16.msra.mxu0 0
        %1762 = vmatpush.bf16.msra.mxu0 0
        %1763 = vmatpush.bf16.msra.mxu0 0
        %1764 = vmatpush.bf16.msra.mxu0 0
        %1765 = vmatpush.bf16.msra.mxu0 %v1296
        %1766 = vmatmul.bf16.gmra.mxu0 %v1496
        %v1767 = vpop.f32.mrf.mxu0
        %v1768 = vadd.f32 %v1755, %v1767
        %v1769 = vpop.f32.mrf.mxu0
        %1770 = vdwg.mxu0
        %1771 = vmatpush.bf16.msra.mxu0 %v1133
        %1772 = vmatpush.bf16.msra.mxu0 %v1129
        %1773 = vmatpush.bf16.msra.mxu0 %v1125
        %1774 = vmatpush.bf16.msra.mxu0 %v1121
        %1775 = vmatpush.bf16.msra.mxu0 %v1117
        %1776 = vmatpush.bf16.msra.mxu0 %v1113
        %1777 = vmatpush.bf16.msra.mxu0 %v1109
        %1778 = vmatpush.bf16.msra.mxu0 %v1105
        %1779 = vmatmul.bf16.gmra.mxu0 %v302
        %v1780 = vpop.f32.mrf.mxu0
        %v1781 = vadd.f32 %v509, %v1780
        %v1782 = vpop.f32.mrf.mxu0
        %1783 = vdwg.mxu0
        %1784 = vmatpush.bf16.msra.mxu0 %v1165
        %1785 = vmatpush.bf16.msra.mxu0 %v1161
        %1786 = vmatpush.bf16.msra.mxu0 %v1157
        %1787 = vmatpush.bf16.msra.mxu0 %v1153
        %1788 = vmatpush.bf16.msra.mxu0 %v1149
        %1789 = vmatpush.bf16.msra.mxu0 %v1145
        %1790 = vmatpush.bf16.msra.mxu0 %v1141
        %1791 = vmatpush.bf16.msra.mxu0 %v1137
        %1792 = vmatmul.bf16.gmra.mxu0 %v303
        %v1793 = vpop.f32.mrf.mxu0
        %v1794 = vadd.f32 %v1781, %v1793
        %v1795 = vpop.f32.mrf.mxu0
        %1796 = vdwg.mxu0
        %1797 = vmatpush.bf16.msra.mxu0 %v1197
        %1798 = vmatpush.bf16.msra.mxu0 %v1193
        %1799 = vmatpush.bf16.msra.mxu0 %v1189
        %1800 = vmatpush.bf16.msra.mxu0 %v1185
        %1801 = vmatpush.bf16.msra.mxu0 %v1181
        %1802 = vmatpush.bf16.msra.mxu0 %v1177
        %1803 = vmatpush.bf16.msra.mxu0 %v1173
        %1804 = vmatpush.bf16.msra.mxu0 %v1169
        %1805 = vmatmul.bf16.gmra.mxu0 %v304
        %v1806 = vpop.f32.mrf.mxu0
        %v1807 = vadd.f32 %v1794, %v1806
        %v1808 = vpop.f32.mrf.mxu0
        %1809 = vdwg.mxu0
        %1810 = vmatpush.bf16.msra.mxu0 %v1229
        %1811 = vmatpush.bf16.msra.mxu0 %v1225
        %1812 = vmatpush.bf16.msra.mxu0 %v1221
        %1813 = vmatpush.bf16.msra.mxu0 %v1217
        %1814 = vmatpush.bf16.msra.mxu0 %v1213
        %1815 = vmatpush.bf16.msra.mxu0 %v1209
        %1816 = vmatpush.bf16.msra.mxu0 %v1205
        %1817 = vmatpush.bf16.msra.mxu0 %v1201
        %1818 = vmatmul.bf16.gmra.mxu0 %v305
        %v1819 = vpop.f32.mrf.mxu0
        %v1820 = vadd.f32 %v1807, %v1819
        %v1821 = vpop.f32.mrf.mxu0
        %1822 = vdwg.mxu0
        %1823 = vmatpush.bf16.msra.mxu0 %v1261
        %1824 = vmatpush.bf16.msra.mxu0 %v1257
        %1825 = vmatpush.bf16.msra.mxu0 %v1253
        %1826 = vmatpush.bf16.msra.mxu0 %v1249
        %1827 = vmatpush.bf16.msra.mxu0 %v1245
        %1828 = vmatpush.bf16.msra.mxu0 %v1241
        %1829 = vmatpush.bf16.msra.mxu0 %v1237
        %1830 = vmatpush.bf16.msra.mxu0 %v1233
        %1831 = vmatmul.bf16.gmra.mxu0 %v306
        %v1832 = vpop.f32.mrf.mxu0
        %v1833 = vadd.f32 %v1820, %v1832
        %v1834 = vpop.f32.mrf.mxu0
        %1835 = vdwg.mxu0
        %1836 = vmatpush.bf16.msra.mxu0 %v1293
        %1837 = vmatpush.bf16.msra.mxu0 %v1289
        %1838 = vmatpush.bf16.msra.mxu0 %v1285
        %1839 = vmatpush.bf16.msra.mxu0 %v1281
        %1840 = vmatpush.bf16.msra.mxu0 %v1277
        %1841 = vmatpush.bf16.msra.mxu0 %v1273
        %1842 = vmatpush.bf16.msra.mxu0 %v1269
        %1843 = vmatpush.bf16.msra.mxu0 %v1265
        %1844 = vmatmul.bf16.gmra.mxu0 %v307
        %v1845 = vpop.f32.mrf.mxu0
        %v1846 = vadd.f32 %v1833, %v1845
        %v1847 = vpop.f32.mrf.mxu0
        %1848 = vdwg.mxu0
        %1849 = vmatpush.bf16.msra.mxu0 0
        %1850 = vmatpush.bf16.msra.mxu0 0
        %1851 = vmatpush.bf16.msra.mxu0 0
        %1852 = vmatpush.bf16.msra.mxu0 0
        %1853 = vmatpush.bf16.msra.mxu0 0
        %1854 = vmatpush.bf16.msra.mxu0 0
        %1855 = vmatpush.bf16.msra.mxu0 0
        %1856 = vmatpush.bf16.msra.mxu0 %v1297
        %1857 = vmatmul.bf16.gmra.mxu0 %v1496
        %v1858 = vpop.f32.mrf.mxu0
        %v1859 = vadd.f32 %v1846, %v1858
        %v1860 = vpop.f32.mrf.mxu0
        %1861 = vdwg.mxu0
        %vm1862 = vcmp.gt.f32.partialorder %v1586, 0.0
        %vm1863 = vcmp.gt.f32.partialorder %v1677, 0.0
        %vm1864 = vcmp.gt.f32.partialorder %v1768, 0.0
        %vm1865 = vcmp.gt.f32.partialorder %v1859, 0.0
        %v1866 = vmul.f32 %v1586, 0.2
        %v1867 = vmul.f32 %v1677, 0.2
        %v1868 = vmul.f32 %v1768, 0.2
        %v1869 = vmul.f32 %v1859, 0.2
        %v1870 = vsel %vm1862, %v1586, %v1866
        %v1871 = vsel %vm1863, %v1677, %v1867
        %v1872 = vsel %vm1864, %v1768, %v1868
        %v1873 = vsel %vm1865, %v1859, %v1869
        %v1874 = vpack.c.bf16 %v1870, %v1870
        %v1875 = vpack.c.bf16 %v1871, %v1871
        %v1876 = vpack.c.bf16 %v1872, %v1872
        %v1877 = vpack.c.bf16 %v1873, %v1873
        %v1878 = vld [vmem:[#allocation6] sm:$0xff]
        %v1879 = vld [vmem:[#allocation6 + $0x8] sm:$0xff]
        %v1880 = vld [vmem:[#allocation6 + $0x10] sm:$0xff]
        %v1881 = vld [vmem:[#allocation6 + $0x18] sm:$0xff]
        %v1882 = vld [vmem:[#allocation6 + $0x20] sm:$0xff]
        %v1883 = vld [vmem:[#allocation6 + $0x28] sm:$0xff]
        %v1884 = vld [vmem:[#allocation6 + $0x30] sm:$0xff]
        %v1885 = vld [vmem:[#allocation6 + $0x38] sm:$0xff]
        %v1886 = vld [vmem:[#allocation6 + $0x40] sm:$0xff]
        %v1887 = vld [vmem:[#allocation6 + $0x48] sm:$0xff]
        %v1888 = vld [vmem:[#allocation6 + $0x50] sm:$0xff]
        %v1889 = vld [vmem:[#allocation6 + $0x58] sm:$0xff]
        %v1890 = vld [vmem:[#allocation6 + $0x60] sm:$0xff]
        %v1891 = vld [vmem:[#allocation6 + $0x68] sm:$0xff]
        %v1892 = vld [vmem:[#allocation6 + $0x70] sm:$0xff]
        %v1893 = vld [vmem:[#allocation6 + $0x78] sm:$0xff]
        %v1894 = vld [vmem:[#allocation6 + $0x80] sm:$0xff]
        %v1895 = vld [vmem:[#allocation6 + $0x88] sm:$0xff]
        %v1896 = vld [vmem:[#allocation6 + $0x90] sm:$0xff]
        %v1897 = vld [vmem:[#allocation6 + $0x98] sm:$0xff]
        %v1898 = vld [vmem:[#allocation6 + $0xa0] sm:$0xff]
        %v1899 = vld [vmem:[#allocation6 + $0xa8] sm:$0xff]
        %v1900 = vld [vmem:[#allocation6 + $0xb0] sm:$0xff]
        %v1901 = vld [vmem:[#allocation6 + $0xb8] sm:$0xff]
        %v1902 = vld [vmem:[#allocation6 + $0xc0] sm:$0xff]
        %v1903 = vld [vmem:[#allocation6 + $0xc8] sm:$0xff]
        %v1904 = vld [vmem:[#allocation6 + $0xd0] sm:$0xff]
        %v1905 = vld [vmem:[#allocation6 + $0xd8] sm:$0xff]
        %v1906 = vld [vmem:[#allocation6 + $0xe0] sm:$0xff]
        %v1907 = vld [vmem:[#allocation6 + $0xe8] sm:$0xff]
        %v1908 = vld [vmem:[#allocation6 + $0xf0] sm:$0xff]
        %v1909 = vld [vmem:[#allocation6 + $0xf8] sm:$0xff]
        %v1910 = vld [vmem:[#allocation6 + $0x100] sm:$0xff]
        %v1911 = vld [vmem:[#allocation6 + $0x108] sm:$0xff]
        %v1912 = vld [vmem:[#allocation6 + $0x110] sm:$0xff]
        %v1913 = vld [vmem:[#allocation6 + $0x118] sm:$0xff]
        %v1914 = vld [vmem:[#allocation6 + $0x120] sm:$0xff]
        %v1915 = vld [vmem:[#allocation6 + $0x128] sm:$0xff]
        %v1916 = vld [vmem:[#allocation6 + $0x130] sm:$0xff]
        %v1917 = vld [vmem:[#allocation6 + $0x138] sm:$0xff]
        %v1918 = vld [vmem:[#allocation6 + $0x140] sm:$0xff]
        %v1919 = vld [vmem:[#allocation6 + $0x148] sm:$0xff]
        %v1920 = vld [vmem:[#allocation6 + $0x150] sm:$0xff]
        %v1921 = vld [vmem:[#allocation6 + $0x158] sm:$0xff]
        %v1922 = vld [vmem:[#allocation6 + $0x160] sm:$0xff]
        %v1923 = vld [vmem:[#allocation6 + $0x168] sm:$0xff]
        %v1924 = vld [vmem:[#allocation6 + $0x170] sm:$0xff]
        %v1925 = vld [vmem:[#allocation6 + $0x178] sm:$0xff]
        %v1926 = vld [vmem:[#allocation6 + $0x180] sm:$0xff]
        %v1927 = vld [vmem:[#allocation6 + $0x188] sm:$0xff]
        %v1928 = vld [vmem:[#allocation6 + $0x190] sm:$0xff]
        %v1929 = vld [vmem:[#allocation6 + $0x198] sm:$0xff]
        %v1930 = vld [vmem:[#allocation6 + $0x1a0] sm:$0xff]
        %v1931 = vld [vmem:[#allocation6 + $0x1a8] sm:$0xff]
        %v1932 = vld [vmem:[#allocation6 + $0x1b0] sm:$0xff]
        %v1933 = vld [vmem:[#allocation6 + $0x1b8] sm:$0xff]
        %v1934 = vld [vmem:[#allocation6 + $0x1c0] sm:$0xff]
        %v1935 = vld [vmem:[#allocation6 + $0x1c8] sm:$0xff]
        %v1936 = vld [vmem:[#allocation6 + $0x1d0] sm:$0xff]
        %v1937 = vld [vmem:[#allocation6 + $0x1d8] sm:$0xff]
        %v1938 = vld [vmem:[#allocation6 + $0x1e0] sm:$0xff]
        %v1939 = vld [vmem:[#allocation6 + $0x1e8] sm:$0xff]
        %v1940 = vld [vmem:[#allocation6 + $0x1f0] sm:$0xff]
        %v1941 = vld [vmem:[#allocation6 + $0x1f8] sm:$0xff]
        %v1943 = vperm.slane %v293, 0
        %v1944 = vperm.slane %v293, 1
        %v2011 = vunpack.c.l.b16 %v1878
        %v2012 = vunpack.c.h.b16 %v1878
        %v2013 = vunpack.c.l.b16 %v1879
        %v2014 = vunpack.c.h.b16 %v1879
        %v2015 = vunpack.c.l.b16 %v1880
        %v2016 = vunpack.c.h.b16 %v1880
        %v2017 = vunpack.c.l.b16 %v1881
        %v2018 = vunpack.c.h.b16 %v1881
        %v2019 = vunpack.c.l.b16 %v1882
        %v2020 = vunpack.c.h.b16 %v1882
        %v2021 = vunpack.c.l.b16 %v1883
        %v2022 = vunpack.c.h.b16 %v1883
        %v2023 = vunpack.c.l.b16 %v1884
        %v2024 = vunpack.c.h.b16 %v1884
        %v2025 = vunpack.c.l.b16 %v1885
        %v2026 = vunpack.c.h.b16 %v1885
        %v2027 = vunpack.c.l.b16 %v1886
        %v2028 = vunpack.c.h.b16 %v1886
        %v2029 = vunpack.c.l.b16 %v1887
        %v2030 = vunpack.c.h.b16 %v1887
        %v2031 = vunpack.c.l.b16 %v1888
        %v2032 = vunpack.c.h.b16 %v1888
        %v2033 = vunpack.c.l.b16 %v1889
        %v2034 = vunpack.c.h.b16 %v1889
        %v2035 = vunpack.c.l.b16 %v1890
        %v2036 = vunpack.c.h.b16 %v1890
        %v2037 = vunpack.c.l.b16 %v1891
        %v2038 = vunpack.c.h.b16 %v1891
        %v2039 = vunpack.c.l.b16 %v1892
        %v2040 = vunpack.c.h.b16 %v1892
        %v2041 = vunpack.c.l.b16 %v1893
        %v2042 = vunpack.c.h.b16 %v1893
        %v2043 = vunpack.c.l.b16 %v1894
        %v2044 = vunpack.c.h.b16 %v1894
        %v2045 = vunpack.c.l.b16 %v1895
        %v2046 = vunpack.c.h.b16 %v1895
        %v2047 = vunpack.c.l.b16 %v1896
        %v2048 = vunpack.c.h.b16 %v1896
        %v2049 = vunpack.c.l.b16 %v1897
        %v2050 = vunpack.c.h.b16 %v1897
        %v2051 = vunpack.c.l.b16 %v1898
        %v2052 = vunpack.c.h.b16 %v1898
        %v2053 = vunpack.c.l.b16 %v1899
        %v2054 = vunpack.c.h.b16 %v1899
        %v2055 = vunpack.c.l.b16 %v1900
        %v2056 = vunpack.c.h.b16 %v1900
        %v2057 = vunpack.c.l.b16 %v1901
        %v2058 = vunpack.c.h.b16 %v1901
        %v2059 = vunpack.c.l.b16 %v1902
        %v2060 = vunpack.c.h.b16 %v1902
        %v2061 = vunpack.c.l.b16 %v1903
        %v2062 = vunpack.c.h.b16 %v1903
        %v2063 = vunpack.c.l.b16 %v1904
        %v2064 = vunpack.c.h.b16 %v1904
        %v2065 = vunpack.c.l.b16 %v1905
        %v2066 = vunpack.c.h.b16 %v1905
        %v2067 = vunpack.c.l.b16 %v1906
        %v2068 = vunpack.c.h.b16 %v1906
        %v2069 = vunpack.c.l.b16 %v1907
        %v2070 = vunpack.c.h.b16 %v1907
        %v2071 = vunpack.c.l.b16 %v1908
        %v2072 = vunpack.c.h.b16 %v1908
        %v2073 = vunpack.c.l.b16 %v1909
        %v2074 = vunpack.c.h.b16 %v1909
        %v2075 = vunpack.c.l.b16 %v1910
        %v2076 = vunpack.c.h.b16 %v1910
        %v2077 = vunpack.c.l.b16 %v1911
        %v2078 = vunpack.c.h.b16 %v1911
        %v2079 = vunpack.c.l.b16 %v1912
        %v2080 = vunpack.c.h.b16 %v1912
        %v2081 = vunpack.c.l.b16 %v1913
        %v2082 = vunpack.c.h.b16 %v1913
        %v2083 = vunpack.c.l.b16 %v1914
        %v2084 = vunpack.c.h.b16 %v1914
        %v2085 = vunpack.c.l.b16 %v1915
        %v2086 = vunpack.c.h.b16 %v1915
        %v2087 = vunpack.c.l.b16 %v1916
        %v2088 = vunpack.c.h.b16 %v1916
        %v2089 = vunpack.c.l.b16 %v1917
        %v2090 = vunpack.c.h.b16 %v1917
        %v2091 = vunpack.c.l.b16 %v1918
        %v2092 = vunpack.c.h.b16 %v1918
        %v2093 = vunpack.c.l.b16 %v1919
        %v2094 = vunpack.c.h.b16 %v1919
        %v2095 = vunpack.c.l.b16 %v1920
        %v2096 = vunpack.c.h.b16 %v1920
        %v2097 = vunpack.c.l.b16 %v1921
        %v2098 = vunpack.c.h.b16 %v1921
        %v2099 = vunpack.c.l.b16 %v1922
        %v2100 = vunpack.c.h.b16 %v1922
        %v2101 = vunpack.c.l.b16 %v1923
        %v2102 = vunpack.c.h.b16 %v1923
        %v2103 = vunpack.c.l.b16 %v1924
        %v2104 = vunpack.c.h.b16 %v1924
        %v2105 = vunpack.c.l.b16 %v1925
        %v2106 = vunpack.c.h.b16 %v1925
        %v2107 = vunpack.c.l.b16 %v1926
        %v2108 = vunpack.c.h.b16 %v1926
        %v2109 = vunpack.c.l.b16 %v1927
        %v2110 = vunpack.c.h.b16 %v1927
        %v2111 = vunpack.c.l.b16 %v1928
        %v2112 = vunpack.c.h.b16 %v1928
        %v2113 = vunpack.c.l.b16 %v1929
        %v2114 = vunpack.c.h.b16 %v1929
        %v2115 = vunpack.c.l.b16 %v1930
        %v2116 = vunpack.c.h.b16 %v1930
        %v2117 = vunpack.c.l.b16 %v1931
        %v2118 = vunpack.c.h.b16 %v1931
        %v2119 = vunpack.c.l.b16 %v1932
        %v2120 = vunpack.c.h.b16 %v1932
        %v2121 = vunpack.c.l.b16 %v1933
        %v2122 = vunpack.c.h.b16 %v1933
        %v2123 = vunpack.c.l.b16 %v1934
        %v2124 = vunpack.c.h.b16 %v1934
        %v2125 = vunpack.c.l.b16 %v1935
        %v2126 = vunpack.c.h.b16 %v1935
        %v2127 = vunpack.c.l.b16 %v1936
        %v2128 = vunpack.c.h.b16 %v1936
        %v2129 = vunpack.c.l.b16 %v1937
        %v2130 = vunpack.c.h.b16 %v1937
        %v2131 = vunpack.c.l.b16 %v1938
        %v2132 = vunpack.c.h.b16 %v1938
        %v2133 = vunpack.c.l.b16 %v1939
        %v2134 = vunpack.c.h.b16 %v1939
        %v2135 = vunpack.c.l.b16 %v1940
        %v2136 = vunpack.c.h.b16 %v1940
        %v2137 = vunpack.c.l.b16 %v1941
        %v2138 = vunpack.c.h.b16 %v1941
        %v2139 = vpack.c.b16 %v2013, %v2011
        %v2140 = vpack.c.b16 %v2014, %v2012
        %v2141 = vpack.c.b16 %v2017, %v2015
        %v2142 = vpack.c.b16 %v2018, %v2016
        %v2143 = vpack.c.b16 %v2021, %v2019
        %v2144 = vpack.c.b16 %v2022, %v2020
        %v2145 = vpack.c.b16 %v2025, %v2023
        %v2146 = vpack.c.b16 %v2026, %v2024
        %v2147 = vpack.c.b16 %v2029, %v2027
        %v2148 = vpack.c.b16 %v2030, %v2028
        %v2149 = vpack.c.b16 %v2033, %v2031
        %v2150 = vpack.c.b16 %v2034, %v2032
        %v2151 = vpack.c.b16 %v2037, %v2035
        %v2152 = vpack.c.b16 %v2038, %v2036
        %v2153 = vpack.c.b16 %v2041, %v2039
        %v2154 = vpack.c.b16 %v2042, %v2040
        %v2155 = vpack.c.b16 %v2045, %v2043
        %v2156 = vpack.c.b16 %v2046, %v2044
        %v2157 = vpack.c.b16 %v2049, %v2047
        %v2158 = vpack.c.b16 %v2050, %v2048
        %v2159 = vpack.c.b16 %v2053, %v2051
        %v2160 = vpack.c.b16 %v2054, %v2052
        %v2161 = vpack.c.b16 %v2057, %v2055
        %v2162 = vpack.c.b16 %v2058, %v2056
        %v2163 = vpack.c.b16 %v2061, %v2059
        %v2164 = vpack.c.b16 %v2062, %v2060
        %v2165 = vpack.c.b16 %v2065, %v2063
        %v2166 = vpack.c.b16 %v2066, %v2064
        %v2167 = vpack.c.b16 %v2069, %v2067
        %v2168 = vpack.c.b16 %v2070, %v2068
        %v2169 = vpack.c.b16 %v2073, %v2071
        %v2170 = vpack.c.b16 %v2074, %v2072
        %v2171 = vpack.c.b16 %v2077, %v2075
        %v2172 = vpack.c.b16 %v2078, %v2076
        %v2173 = vpack.c.b16 %v2081, %v2079
        %v2174 = vpack.c.b16 %v2082, %v2080
        %v2175 = vpack.c.b16 %v2085, %v2083
        %v2176 = vpack.c.b16 %v2086, %v2084
        %v2177 = vpack.c.b16 %v2089, %v2087
        %v2178 = vpack.c.b16 %v2090, %v2088
        %v2179 = vpack.c.b16 %v2093, %v2091
        %v2180 = vpack.c.b16 %v2094, %v2092
        %v2181 = vpack.c.b16 %v2097, %v2095
        %v2182 = vpack.c.b16 %v2098, %v2096
        %v2183 = vpack.c.b16 %v2101, %v2099
        %v2184 = vpack.c.b16 %v2102, %v2100
        %v2185 = vpack.c.b16 %v2105, %v2103
        %v2186 = vpack.c.b16 %v2106, %v2104
        %v2187 = vpack.c.b16 %v2109, %v2107
        %v2188 = vpack.c.b16 %v2110, %v2108
        %v2189 = vpack.c.b16 %v2113, %v2111
        %v2190 = vpack.c.b16 %v2114, %v2112
        %v2191 = vpack.c.b16 %v2117, %v2115
        %v2192 = vpack.c.b16 %v2118, %v2116
        %v2193 = vpack.c.b16 %v2121, %v2119
        %v2194 = vpack.c.b16 %v2122, %v2120
        %v2195 = vpack.c.b16 %v2125, %v2123
        %v2196 = vpack.c.b16 %v2126, %v2124
        %v2197 = vpack.c.b16 %v2129, %v2127
        %v2198 = vpack.c.b16 %v2130, %v2128
        %v2199 = vpack.c.b16 %v2133, %v2131
        %v2200 = vpack.c.b16 %v2134, %v2132
        %v2201 = vpack.c.b16 %v2137, %v2135
        %v2202 = vpack.c.b16 %v2138, %v2136
        %2267 = vmatpush.bf16.msra.mxu0 %v2153
        %2268 = vmatpush.bf16.msra.mxu0 %v2151
        %2269 = vmatpush.bf16.msra.mxu0 %v2149
        %2270 = vmatpush.bf16.msra.mxu0 %v2147
        %2271 = vmatpush.bf16.msra.mxu0 %v2145
        %2272 = vmatpush.bf16.msra.mxu0 %v2143
        %2273 = vmatpush.bf16.msra.mxu0 %v2141
        %2274 = vmatpush.bf16.msra.mxu0 %v2139
        %2275 = vmatmul.bf16.gmra.mxu0 %v1874
        %v2276 = vpop.f32.mrf.mxu0
        %v2277 = vadd.f32 %v1943, %v2276
        %v2278 = vpop.f32.mrf.mxu0
        %2279 = vdwg.mxu0
        %2280 = vmatpush.bf16.msra.mxu0 %v2169
        %2281 = vmatpush.bf16.msra.mxu0 %v2167
        %2282 = vmatpush.bf16.msra.mxu0 %v2165
        %2283 = vmatpush.bf16.msra.mxu0 %v2163
        %2284 = vmatpush.bf16.msra.mxu0 %v2161
        %2285 = vmatpush.bf16.msra.mxu0 %v2159
        %2286 = vmatpush.bf16.msra.mxu0 %v2157
        %2287 = vmatpush.bf16.msra.mxu0 %v2155
        %2288 = vmatmul.bf16.gmra.mxu0 %v1875
        %v2289 = vpop.f32.mrf.mxu0
        %v2290 = vadd.f32 %v2277, %v2289
        %v2291 = vpop.f32.mrf.mxu0
        %2292 = vdwg.mxu0
        %2293 = vmatpush.bf16.msra.mxu0 %v2185
        %2294 = vmatpush.bf16.msra.mxu0 %v2183
        %2295 = vmatpush.bf16.msra.mxu0 %v2181
        %2296 = vmatpush.bf16.msra.mxu0 %v2179
        %2297 = vmatpush.bf16.msra.mxu0 %v2177
        %2298 = vmatpush.bf16.msra.mxu0 %v2175
        %2299 = vmatpush.bf16.msra.mxu0 %v2173
        %2300 = vmatpush.bf16.msra.mxu0 %v2171
        %2301 = vmatmul.bf16.gmra.mxu0 %v1876
        %v2302 = vpop.f32.mrf.mxu0
        %v2303 = vadd.f32 %v2290, %v2302
        %v2304 = vpop.f32.mrf.mxu0
        %2305 = vdwg.mxu0
        %2306 = vmatpush.bf16.msra.mxu0 %v2201
        %2307 = vmatpush.bf16.msra.mxu0 %v2199
        %2308 = vmatpush.bf16.msra.mxu0 %v2197
        %2309 = vmatpush.bf16.msra.mxu0 %v2195
        %2310 = vmatpush.bf16.msra.mxu0 %v2193
        %2311 = vmatpush.bf16.msra.mxu0 %v2191
        %2312 = vmatpush.bf16.msra.mxu0 %v2189
        %2313 = vmatpush.bf16.msra.mxu0 %v2187
        %2314 = vmatmul.bf16.gmra.mxu0 %v1877
        %v2315 = vpop.f32.mrf.mxu0
        %v2316 = vadd.f32 %v2303, %v2315
        %v2317 = vpop.f32.mrf.mxu0
        %2318 = vdwg.mxu0
        %2319 = vmatpush.bf16.msra.mxu0 %v2154
        %2320 = vmatpush.bf16.msra.mxu0 %v2152
        %2321 = vmatpush.bf16.msra.mxu0 %v2150
        %2322 = vmatpush.bf16.msra.mxu0 %v2148
        %2323 = vmatpush.bf16.msra.mxu0 %v2146
        %2324 = vmatpush.bf16.msra.mxu0 %v2144
        %2325 = vmatpush.bf16.msra.mxu0 %v2142
        %2326 = vmatpush.bf16.msra.mxu0 %v2140
        %2327 = vmatmul.bf16.gmra.mxu0 %v1874
        %v2328 = vpop.f32.mrf.mxu0
        %v2329 = vadd.f32 %v1944, %v2328
        %v2330 = vpop.f32.mrf.mxu0
        %2331 = vdwg.mxu0
        %2332 = vmatpush.bf16.msra.mxu0 %v2170
        %2333 = vmatpush.bf16.msra.mxu0 %v2168
        %2334 = vmatpush.bf16.msra.mxu0 %v2166
        %2335 = vmatpush.bf16.msra.mxu0 %v2164
        %2336 = vmatpush.bf16.msra.mxu0 %v2162
        %2337 = vmatpush.bf16.msra.mxu0 %v2160
        %2338 = vmatpush.bf16.msra.mxu0 %v2158
        %2339 = vmatpush.bf16.msra.mxu0 %v2156
        %2340 = vmatmul.bf16.gmra.mxu0 %v1875
        %v2341 = vpop.f32.mrf.mxu0
        %v2342 = vadd.f32 %v2329, %v2341
        %v2343 = vpop.f32.mrf.mxu0
        %2344 = vdwg.mxu0
        %2345 = vmatpush.bf16.msra.mxu0 %v2186
        %2346 = vmatpush.bf16.msra.mxu0 %v2184
        %2347 = vmatpush.bf16.msra.mxu0 %v2182
        %2348 = vmatpush.bf16.msra.mxu0 %v2180
        %2349 = vmatpush.bf16.msra.mxu0 %v2178
        %2350 = vmatpush.bf16.msra.mxu0 %v2176
        %2351 = vmatpush.bf16.msra.mxu0 %v2174
        %2352 = vmatpush.bf16.msra.mxu0 %v2172
        %2353 = vmatmul.bf16.gmra.mxu0 %v1876
        %v2354 = vpop.f32.mrf.mxu0
        %v2355 = vadd.f32 %v2342, %v2354
        %v2356 = vpop.f32.mrf.mxu0
        %2357 = vdwg.mxu0
        %2358 = vmatpush.bf16.msra.mxu0 %v2202
        %2359 = vmatpush.bf16.msra.mxu0 %v2200
        %2360 = vmatpush.bf16.msra.mxu0 %v2198
        %2361 = vmatpush.bf16.msra.mxu0 %v2196
        %2362 = vmatpush.bf16.msra.mxu0 %v2194
        %2363 = vmatpush.bf16.msra.mxu0 %v2192
        %2364 = vmatpush.bf16.msra.mxu0 %v2190
        %2365 = vmatpush.bf16.msra.mxu0 %v2188
        %2366 = vmatmul.bf16.gmra.mxu0 %v1877
        %v2367 = vpop.f32.mrf.mxu0
        %v2368 = vadd.f32 %v2355, %v2367
        %v2369 = vpop.f32.mrf.mxu0
        %2370 = vdwg.mxu0
        %vm2371 = vcmp.gt.f32.partialorder %v2316, 0.0
        %vm2372 = vcmp.gt.f32.partialorder %v2368, 0.0
        %v2373 = vmul.f32 %v2316, 0.2
        %v2374 = vmul.f32 %v2368, 0.2
        %v2375 = vsel %vm2371, %v2316, %v2373
        %v2376 = vsel %vm2372, %v2368, %v2374
        %v2377 = vld [vmem:[%s3] sm:$0x3]
        %v2378 = vunpack.c.l.bf16 %v2377
        %v2380 = vperm.slane %v2378, 0
        %v2381 = vperm.slane %v2378, 2
        %v2384 = vperm.slane %v2380, 0
        %v2385 = vperm.slane %v2381, 0
        %v2386 = vmul.f32 %v2375, %v2384
        %v2387 = vmul.f32 %v2376, %v2385
        %v2388 = vadd.f32 %v2386, %v2387
        %2389 = vadd.xlane.f32.xlu0 %v2388
        %v2390 = vpop.xlane.xlu0 %2389
        %v2392 = vperm.slane %v294, 0
        %v2394 = vadd.f32 %v2390, %v2392
        %v2395 = vtanh.pop %v2394
        %v2396 = vadd.f32 %v2395, 1.0
        %v2397 = vmul.f32 %v2396, 0.5
        %vm2398 = vcmask 7168
        %2399 = vst.msk [vmem:[%s290] sm:$0xff] %vm2398, %v2397
        %p2400 = scmp.lt.s32.totalorder %s21, 2
        %s2401 = scalar_select %p2400, %s21, 2
        %s2402 = smul.addr %s2401, 8
        %s2403 = scalar_lea.vmem %s5, %s2402
        // Predicated region
        $region57: #{tpu_custom_call.1} parent=39 // pred_check
          %p2404 = pneg %p149
        $region58: #{tpu_custom_call.1} parent=39 // pred_check_branch
          %2406 = sbr.rel (%p2404) target = $region60
        $region59: #{tpu_custom_call.1} parent=39 // pred_region
          _
        $region60: #{tpu_custom_call.1} parent=39 // pred_fallthru
          _
      $region40: #{tpu_custom_call.1} parent=5 // pred_fallthru
        _
      %p2407 = scmp.le.s32.totalorder 2, %s16
      // Predicated region
      $region61: #{tpu_custom_call.1} parent=5 // pred_check
        %p2408 = pneg %p2407
      $region62: #{tpu_custom_call.1} parent=5 // pred_check_branch
        %2410 = sbr.rel (%p2408) target = $region64
      $region63: #{tpu_custom_call.1} parent=5 // pred_region
        %s2411 = ssub.s32 %s16, 2
        // Predicated region
        $region65: #{tpu_custom_call.1} parent=63 // pred_check
          %p2412 = pneg %p155
        $region66: #{tpu_custom_call.1} parent=63 // pred_check_branch
          %2414 = sbr.rel (%p2412) target = $region68
        $region67: #{tpu_custom_call.1} parent=63 // pred_region
          %p2415 = scmp.lt.s32.totalorder %s22, 2
          %s2416 = scalar_select %p2415, %s22, 2
          %s2417 = smul.addr %s2416, 8
          %s2418 = scalar_lea.vmem %s5, %s2417
        $region68: #{tpu_custom_call.1} parent=63 // pred_fallthru
          _
      $region64: #{tpu_custom_call.1} parent=5 // pred_fallthru
        _
    $region6: #{tpu_custom_call.1} parent=1 // loop_footer
      %s20 = sadd.s32 1, %s16
    $region7: #{tpu_custom_call.1} parent=1 // loop_footer_branch
      %15 = sbr.rel target = $region3
    $region8: #{tpu_custom_call.1} parent=1 // loop_exit
      _
    %2419 = vsyncpa [#allocation3], 1
    %s2420 = scalar_lea.sflag [#allocation3], 1
    %2421 = vsyncpa %s2420, 1
    %2422 = vsyncpa [#allocation5], 1
    %2423 = vsyncpa [#allocation8], 1

</llo_original>
